<compile_context>
chip_gen: v7x
topology: tpu7x:2x2x1
jax: 0.10.0
libtpu: 0.0.40
codegen_flags: <defaults>
</compile_context>

<pallas_src>
import functools

import jax
import jax.numpy as jnp
from jax.experimental import pallas as pl
from jax.experimental.pallas import tpu as pltpu


def _attention_kernel(xq_ref, xkv_ref, wq_ref, wk_ref, wv_ref, wout_ref,
                      bout_ref, out_ref, *, heads, compute_dtype):
    # xq_ref:   (1, tq, D)        query rows of this grid step
    # xkv_ref:  (1, N, D)         full token sequence (for K / V)
    # wq_ref:   (heads, D, dh)    q projection, softmax scale pre-folded
    # wk_ref:   (heads, D, dh)
    # wv_ref:   (heads, D, dh)
    # wout_ref: (heads, dh, D)    output projection split per head
    # bout_ref: (1, D)            output projection bias (f32)
    # out_ref:  (1, tq, D)
    tq = xq_ref.shape[1]
    N = xkv_ref.shape[1]
    D = xkv_ref.shape[2]

    xq = xq_ref[0].astype(compute_dtype)          # (tq, D)
    xkv = xkv_ref[0].astype(compute_dtype)        # (N,  D)

    # Broadcast tokens across heads (cheap major-dim replication) so every
    # matmul below is a head-batched, lane-dense dot_general on the MXU.
    xq_b = jnp.broadcast_to(xq[None], (heads, tq, D))
    xkv_b = jnp.broadcast_to(xkv[None], (heads, N, D))

    # Projections (contraction over D), accumulate in f32.
    q = jnp.einsum("htd,hdf->htf", xq_b, wq_ref[...],
                   preferred_element_type=jnp.float32)        # (h, tq, dh), scaled
    k = jnp.einsum("hnd,hdf->hnf", xkv_b, wk_ref[...],
                   preferred_element_type=jnp.float32)        # (h, N, dh)
    v = jnp.einsum("hnd,hdf->hnf", xkv_b, wv_ref[...],
                   preferred_element_type=jnp.float32)        # (h, N, dh)

    # Scores: rhs-contracting dot_general, no materialized transpose of k.
    scores = jnp.einsum("htf,hnf->htn",
                        q.astype(compute_dtype), k.astype(compute_dtype),
                        preferred_element_type=jnp.float32)   # (h, tq, N)

    # Numerically-stable softmax in f32; divide goes to the EUP.
    m = jnp.max(scores, axis=-1, keepdims=True)
    e = jnp.exp(scores - m)
    s = jnp.sum(e, axis=-1, keepdims=True)
    p = e * pl.reciprocal(s, approx=True)                     # (h, tq, N)

    # Attention-weighted values.
    o = jnp.einsum("htn,hnf->htf",
                   p.astype(compute_dtype), v.astype(compute_dtype),
                   preferred_element_type=jnp.float32)        # (h, tq, dh)

    # Output projection with the head merge folded in:
    #   concat_h(o[h]) @ wout == sum_h o[h] @ wout[h*dh:(h+1)*dh, :]
    proj_h = jnp.einsum("htf,hfd->htd",
                        o.astype(compute_dtype), wout_ref[...],
                        preferred_element_type=jnp.float32)   # (h, tq, D)
    proj = jnp.sum(proj_h, axis=0) + bout_ref[0]              # (tq, D), f32
    out_ref[0] = proj.astype(out_ref.dtype)


def _pick_q_tile(n):
    """Query-tile rows: multiple of 8 (sublane rule) that divides N, else full N."""
    if n <= 128:
        return n
    for cand in (128, 64, 32, 16, 8):
        if n % cand == 0:
            return cand
    return n


def attention_pallas(x, wqkv, wout, bout, *, heads, dim_head,
                     compute_dtype=jnp.bfloat16):
    """x: (B, N, D); wqkv: (D, 3*heads*dim_head); wout: (heads*dim_head, D); bout: (D,)."""
    B, N, D = x.shape
    inner = heads * dim_head
    assert wqkv.shape == (D, 3 * inner)
    assert wout.shape == (inner, D)
    scale = dim_head ** (-0.5)

    # Host-side (one-time) weight prep: split fused qkv, fold scale into wq,
    # lay each projection out per head, cast matmul operands to compute dtype.
    wq = wqkv[:, 0 * inner:1 * inner] * scale
    wk = wqkv[:, 1 * inner:2 * inner]
    wv = wqkv[:, 2 * inner:3 * inner]

    def per_head_in(w):   # (D, heads*dh) -> (heads, D, dh)
        return jnp.transpose(w.reshape(D, heads, dim_head), (1, 0, 2)).astype(compute_dtype)

    wq_h = per_head_in(wq)
    wk_h = per_head_in(wk)
    wv_h = per_head_in(wv)
    wout_h = wout.reshape(heads, dim_head, D).astype(compute_dtype)   # (heads, dh, D)
    bout2 = bout.reshape(1, D).astype(jnp.float32)

    tq = _pick_q_tile(N)
    grid = (B, N // tq)

    kernel = functools.partial(_attention_kernel, heads=heads,
                               compute_dtype=compute_dtype)

    return pl.pallas_call(
        kernel,
        out_shape=jax.ShapeDtypeStruct((B, N, D), x.dtype),
        grid_spec=pltpu.PrefetchScalarGridSpec(
            num_scalar_prefetch=0,
            grid=grid,
            in_specs=[
                pl.BlockSpec((1, tq, D), lambda b, qi: (b, qi, 0)),            # query rows
                pl.BlockSpec((1, N, D), lambda b, qi: (b, 0, 0)),              # full seq (K/V)
                pl.BlockSpec((heads, D, dim_head), lambda b, qi: (0, 0, 0)),   # wq (resident)
                pl.BlockSpec((heads, D, dim_head), lambda b, qi: (0, 0, 0)),   # wk
                pl.BlockSpec((heads, D, dim_head), lambda b, qi: (0, 0, 0)),   # wv
                pl.BlockSpec((heads, dim_head, D), lambda b, qi: (0, 0, 0)),   # wout
                pl.BlockSpec((1, D), lambda b, qi: (0, 0)),                    # bias
            ],
            out_specs=pl.BlockSpec((1, tq, D), lambda b, qi: (b, qi, 0)),
        ),
        compiler_params=pltpu.CompilerParams(
            dimension_semantics=("parallel", "parallel")),
    )(x, x, wq_h, wk_h, wv_h, wout_h, bout2)


def attention_reference(x, wqkv, wout, bout, *, heads, dim_head):
    """Pure-JAX f32 reference matching the PyTorch forward (mask=None, dropout=0)."""
    B, N, D = x.shape
    inner = heads * dim_head
    scale = dim_head ** (-0.5)
    qkv = x @ wqkv
    q, k, v = jnp.split(qkv, 3, axis=-1)

    def to_heads(t):  # b n (h d) -> b h n d
        return t.reshape(B, N, heads, dim_head).transpose(0, 2, 1, 3)

    q, k, v = map(to_heads, (q, k, v))
    dots = jnp.einsum("bhnd,bhmd->bhnm", q, k) * scale
    attn = jax.nn.softmax(dots, axis=-1)
    out = jnp.einsum("bhnm,bhmd->bhnd", attn, v)
    out = out.transpose(0, 2, 1, 3).reshape(B, N, inner)
    return out @ wout + bout


if __name__ == "__main__":
    # Small shapes consistent with the module.
    B, N, dim = 2, 8, 32
    heads, dim_head = 4, 16
    inner = heads * dim_head

    key = jax.random.PRNGKey(0)
    kx, kqkv, kout, kb = jax.random.split(key, 4)

    x = jax.random.normal(kx, (B, N, dim), dtype=jnp.float32)
    # PyTorch stores Linear weight as (out, in); here kept pre-transposed so the
    # kernel computes x @ W.
    wqkv = jax.random.normal(kqkv, (dim, 3 * inner), dtype=jnp.float32) * 0.05
    wout = jax.random.normal(kout, (inner, dim), dtype=jnp.float32) * 0.05
    bout = jax.random.normal(kb, (dim,), dtype=jnp.float32) * 0.05

    y_ref = attention_reference(x, wqkv, wout, bout, heads=heads, dim_head=dim_head)

    # f32 compute path: tight check of kernel structure.
    y_f32 = attention_pallas(x, wqkv, wout, bout, heads=heads, dim_head=dim_head,
                             compute_dtype=jnp.float32)
    y_f32 = jax.block_until_ready(y_f32)
    assert jnp.allclose(y_f32, y_ref, atol=1e-3, rtol=1e-3), "f32 kernel mismatch vs reference"

    # bf16 MXU-operand path (default): looser tolerance per bf16 precision.
    y_bf16 = attention_pallas(x, wqkv, wout, bout, heads=heads, dim_head=dim_head,
                              compute_dtype=jnp.bfloat16)
    y_bf16 = jax.block_until_ready(y_bf16)
    assert jnp.allclose(y_bf16, y_ref, atol=2e-2, rtol=2e-2), "bf16 kernel mismatch vs reference"

    print("KERNEL_OK")
</pallas_src>

<mosaic_0001>
module attributes {stable_mosaic.version = 11 : i64} {
  func.func @_attention_kernel(%arg0: i32, %arg1: i32, %arg2: memref<1x8x32xf32, #tpu.memory_space<vmem>>, %arg3: memref<1x8x32xf32, #tpu.memory_space<vmem>>, %arg4: memref<4x32x16xf32, #tpu.memory_space<vmem>>, %arg5: memref<4x32x16xf32, #tpu.memory_space<vmem>>, %arg6: memref<4x32x16xf32, #tpu.memory_space<vmem>>, %arg7: memref<4x16x32xf32, #tpu.memory_space<vmem>>, %arg8: memref<1x32xf32, #tpu.memory_space<vmem>>, %arg9: memref<1x8x32xf32, #tpu.memory_space<vmem>>) attributes {dimension_semantics = [#tpu.dimension_semantics<parallel>, #tpu.dimension_semantics<parallel>], iteration_bounds = array<i64: 2, 1>, scalar_prefetch = 0 : i64, scratch_operands = 0 : i64, tpu.core_type = #tpu.core_type<tc>, window_params = [{transform_indices = @transform_0, window_bounds = array<i64: 1, 8, 32>}, {transform_indices = @transform_1, window_bounds = array<i64: 1, 8, 32>}, {pipeline_mode = #tpu.pipeline_mode<synchronous>, transform_indices = @transform_2, window_bounds = array<i64: 4, 32, 16>}, {pipeline_mode = #tpu.pipeline_mode<synchronous>, transform_indices = @transform_3, window_bounds = array<i64: 4, 32, 16>}, {pipeline_mode = #tpu.pipeline_mode<synchronous>, transform_indices = @transform_4, window_bounds = array<i64: 4, 32, 16>}, {pipeline_mode = #tpu.pipeline_mode<synchronous>, transform_indices = @transform_5, window_bounds = array<i64: 4, 16, 32>}, {pipeline_mode = #tpu.pipeline_mode<synchronous>, transform_indices = @transform_6, window_bounds = array<i64: 1, 32>}, {transform_indices = @transform_7, window_bounds = array<i64: 1, 8, 32>}]} {
    %c0 = arith.constant 0 : index
    %c0_0 = arith.constant 0 : index
    %c0_1 = arith.constant 0 : index
    %0 = vector.load %arg2[%c0, %c0_0, %c0_1] : memref<1x8x32xf32, #tpu.memory_space<vmem>>, vector<1x8x32xf32>
    %1 = vector.shape_cast %0 : vector<1x8x32xf32> to vector<8x32xf32>
    %c0_2 = arith.constant 0 : index
    %c0_3 = arith.constant 0 : index
    %c0_4 = arith.constant 0 : index
    %2 = vector.load %arg3[%c0_2, %c0_3, %c0_4] : memref<1x8x32xf32, #tpu.memory_space<vmem>>, vector<1x8x32xf32>
    %3 = vector.shape_cast %2 : vector<1x8x32xf32> to vector<8x32xf32>
    %4 = vector.shape_cast %1 : vector<8x32xf32> to vector<1x8x32xf32>
    %5 = vector.shape_cast %4 : vector<1x8x32xf32> to vector<1x8x32xf32>
    %6 = vector.broadcast %5 : vector<1x8x32xf32> to vector<4x8x32xf32>
    %7 = vector.shape_cast %3 : vector<8x32xf32> to vector<1x8x32xf32>
    %8 = vector.shape_cast %7 : vector<1x8x32xf32> to vector<1x8x32xf32>
    %9 = vector.broadcast %8 : vector<1x8x32xf32> to vector<4x8x32xf32>
    %c0_5 = arith.constant 0 : index
    %c0_6 = arith.constant 0 : index
    %c0_7 = arith.constant 0 : index
    %10 = vector.load %arg4[%c0_5, %c0_6, %c0_7] : memref<4x32x16xf32, #tpu.memory_space<vmem>>, vector<4x32x16xf32>
    "tpu.trace_start"() <{level = 10 : i32, message = "htd,hdf->htf"}> : () -> ()
    %cst = arith.constant dense<0.000000e+00> : vector<4x8x16xf32>
    %11 = tpu.matmul %6, %10, %cst {dimension_numbers = #tpu.dot_dimension_numbers<[2], [1], [1], [2], [0, 0, 0, 1, 1, 2], [0], [0]>} : vector<4x8x32xf32>, vector<4x32x16xf32>, vector<4x8x16xf32> -> vector<4x8x16xf32>
    "tpu.trace_stop"() : () -> ()
    %c0_8 = arith.constant 0 : index
    %c0_9 = arith.constant 0 : index
    %c0_10 = arith.constant 0 : index
    %12 = vector.load %arg5[%c0_8, %c0_9, %c0_10] : memref<4x32x16xf32, #tpu.memory_space<vmem>>, vector<4x32x16xf32>
    "tpu.trace_start"() <{level = 10 : i32, message = "hnd,hdf->hnf"}> : () -> ()
    %cst_11 = arith.constant dense<0.000000e+00> : vector<4x8x16xf32>
    %13 = tpu.matmul %9, %12, %cst_11 {dimension_numbers = #tpu.dot_dimension_numbers<[2], [1], [1], [2], [0, 0, 0, 1, 1, 2], [0], [0]>} : vector<4x8x32xf32>, vector<4x32x16xf32>, vector<4x8x16xf32> -> vector<4x8x16xf32>
    "tpu.trace_stop"() : () -> ()
    %c0_12 = arith.constant 0 : index
    %c0_13 = arith.constant 0 : index
    %c0_14 = arith.constant 0 : index
    %14 = vector.load %arg6[%c0_12, %c0_13, %c0_14] : memref<4x32x16xf32, #tpu.memory_space<vmem>>, vector<4x32x16xf32>
    "tpu.trace_start"() <{level = 10 : i32, message = "hnd,hdf->hnf"}> : () -> ()
    %cst_15 = arith.constant dense<0.000000e+00> : vector<4x8x16xf32>
    %15 = tpu.matmul %9, %14, %cst_15 {dimension_numbers = #tpu.dot_dimension_numbers<[2], [1], [1], [2], [0, 0, 0, 1, 1, 2], [0], [0]>} : vector<4x8x32xf32>, vector<4x32x16xf32>, vector<4x8x16xf32> -> vector<4x8x16xf32>
    "tpu.trace_stop"() : () -> ()
    "tpu.trace_start"() <{level = 10 : i32, message = "htf,hnf->htn"}> : () -> ()
    %cst_16 = arith.constant dense<0.000000e+00> : vector<4x8x8xf32>
    %16 = tpu.matmul %11, %13, %cst_16 {dimension_numbers = #tpu.dot_dimension_numbers<[2], [2], [1], [1], [0, 0, 0, 1, 1, 1], [0], [0]>} : vector<4x8x16xf32>, vector<4x8x16xf32>, vector<4x8x8xf32> -> vector<4x8x8xf32>
    "tpu.trace_stop"() : () -> ()
    %cst_17 = arith.constant dense<0xFF800000> : vector<4x8xf32>
    %17 = vector.multi_reduction <maximumf>, %16, %cst_17 [2] : vector<4x8x8xf32> to vector<4x8xf32>
    %18 = vector.shape_cast %17 : vector<4x8xf32> to vector<4x8x1xf32>
    %19 = vector.broadcast %18 : vector<4x8x1xf32> to vector<4x8x8xf32>
    %20 = arith.subf %16, %19 : vector<4x8x8xf32>
    %21 = math.exp %20 : vector<4x8x8xf32>
    %cst_18 = arith.constant dense<0.000000e+00> : vector<4x8xf32>
    %22 = vector.multi_reduction <add>, %21, %cst_18 [2] : vector<4x8x8xf32> to vector<4x8xf32>
    %23 = vector.shape_cast %22 : vector<4x8xf32> to vector<4x8x1xf32>
    %24 = tpu.reciprocal %23 {approx = true} : vector<4x8x1xf32> -> vector<4x8x1xf32>
    %25 = vector.broadcast %24 : vector<4x8x1xf32> to vector<4x8x8xf32>
    %26 = arith.mulf %21, %25 : vector<4x8x8xf32>
    "tpu.trace_start"() <{level = 10 : i32, message = "htn,hnf->htf"}> : () -> ()
    %cst_19 = arith.constant dense<0.000000e+00> : vector<4x8x16xf32>
    %27 = tpu.matmul %26, %15, %cst_19 {dimension_numbers = #tpu.dot_dimension_numbers<[2], [1], [1], [2], [0, 0, 0, 1, 1, 2], [0], [0]>} : vector<4x8x8xf32>, vector<4x8x16xf32>, vector<4x8x16xf32> -> vector<4x8x16xf32>
    "tpu.trace_stop"() : () -> ()
    %c0_20 = arith.constant 0 : index
    %c0_21 = arith.constant 0 : index
    %c0_22 = arith.constant 0 : index
    %28 = vector.load %arg7[%c0_20, %c0_21, %c0_22] : memref<4x16x32xf32, #tpu.memory_space<vmem>>, vector<4x16x32xf32>
    "tpu.trace_start"() <{level = 10 : i32, message = "htf,hfd->htd"}> : () -> ()
    %cst_23 = arith.constant dense<0.000000e+00> : vector<4x8x32xf32>
    %29 = tpu.matmul %27, %28, %cst_23 {dimension_numbers = #tpu.dot_dimension_numbers<[2], [1], [1], [2], [0, 0, 0, 1, 1, 2], [0], [0]>} : vector<4x8x16xf32>, vector<4x16x32xf32>, vector<4x8x32xf32> -> vector<4x8x32xf32>
    "tpu.trace_stop"() : () -> ()
    %cst_24 = arith.constant dense<0.000000e+00> : vector<8x32xf32>
    %30 = vector.multi_reduction <add>, %29, %cst_24 [0] : vector<4x8x32xf32> to vector<8x32xf32>
    %c0_25 = arith.constant 0 : index
    %c0_26 = arith.constant 0 : index
    %31 = vector.load %arg8[%c0_25, %c0_26] : memref<1x32xf32, #tpu.memory_space<vmem>>, vector<1x32xf32>
    %32 = vector.shape_cast %31 : vector<1x32xf32> to vector<32xf32>
    %33 = vector.shape_cast %32 : vector<32xf32> to vector<1x32xf32>
    %34 = vector.broadcast %33 : vector<1x32xf32> to vector<8x32xf32>
    %35 = arith.addf %30, %34 : vector<8x32xf32>
    %c0_27 = arith.constant 0 : index
    %c0_28 = arith.constant 0 : index
    %c0_29 = arith.constant 0 : index
    %36 = vector.load %arg9[%c0_27, %c0_28, %c0_29] : memref<1x8x32xf32, #tpu.memory_space<vmem>>, vector<1x8x32xf32>
    %37 = vector.shape_cast %36 : vector<1x8x32xf32> to vector<8x32xf32>
    %38 = vector.shape_cast %35 : vector<8x32xf32> to vector<1x8x32xf32>
    tpu.vector_store %arg9[%c0_27, %c0_28, %c0_29], %38 {strides = array<i32>} : memref<1x8x32xf32, #tpu.memory_space<vmem>>, vector<1x8x32xf32>,
    return
  }
  func.func @transform_0(%arg0: i32, %arg1: i32) -> (i32, i32, i32) {
    %c0_i32 = arith.constant 0 : i32
    %c0_i32_0 = arith.constant 0 : i32
    return %arg0, %arg1, %c0_i32 : i32, i32, i32
  }
  func.func @transform_1(%arg0: i32, %arg1: i32) -> (i32, i32, i32) {
    %c0_i32 = arith.constant 0 : i32
    %c0_i32_0 = arith.constant 0 : i32
    %c0_i32_1 = arith.constant 0 : i32
    return %arg0, %c0_i32, %c0_i32_0 : i32, i32, i32
  }
  func.func @transform_2(%arg0: i32, %arg1: i32) -> (i32, i32, i32) {
    %c0_i32 = arith.constant 0 : i32
    %c0_i32_0 = arith.constant 0 : i32
    %c0_i32_1 = arith.constant 0 : i32
    %c0_i32_2 = arith.constant 0 : i32
    return %c0_i32, %c0_i32_0, %c0_i32_1 : i32, i32, i32
  }
  func.func @transform_3(%arg0: i32, %arg1: i32) -> (i32, i32, i32) {
    %c0_i32 = arith.constant 0 : i32
    %c0_i32_0 = arith.constant 0 : i32
    %c0_i32_1 = arith.constant 0 : i32
    %c0_i32_2 = arith.constant 0 : i32
    return %c0_i32, %c0_i32_0, %c0_i32_1 : i32, i32, i32
  }
  func.func @transform_4(%arg0: i32, %arg1: i32) -> (i32, i32, i32) {
    %c0_i32 = arith.constant 0 : i32
    %c0_i32_0 = arith.constant 0 : i32
    %c0_i32_1 = arith.constant 0 : i32
    %c0_i32_2 = arith.constant 0 : i32
    return %c0_i32, %c0_i32_0, %c0_i32_1 : i32, i32, i32
  }
  func.func @transform_5(%arg0: i32, %arg1: i32) -> (i32, i32, i32) {
    %c0_i32 = arith.constant 0 : i32
    %c0_i32_0 = arith.constant 0 : i32
    %c0_i32_1 = arith.constant 0 : i32
    %c0_i32_2 = arith.constant 0 : i32
    return %c0_i32, %c0_i32_0, %c0_i32_1 : i32, i32, i32
  }
  func.func @transform_6(%arg0: i32, %arg1: i32) -> (i32, i32) {
    %c0_i32 = arith.constant 0 : i32
    %c0_i32_0 = arith.constant 0 : i32
    %c0_i32_1 = arith.constant 0 : i32
    return %c0_i32, %c0_i32_0 : i32, i32
  }
  func.func @transform_7(%arg0: i32, %arg1: i32) -> (i32, i32, i32) {
    %c0_i32 = arith.constant 0 : i32
    %c0_i32_0 = arith.constant 0 : i32
    return %arg0, %arg1, %c0_i32 : i32, i32, i32
  }
}

</mosaic_0001>

<llo_original>
// kernel: tpu_custom_call.1
$region0: #{tpu_custom_call.1}
  #allocation0 [shape = 'u32[]', space=smem, size = 0x4, offset = 0x4, fixed_abs, tag = 'smem constant byte address 0x4 - core index']
  #allocation1 [shape = 'u32[144,128]{1,0:T(1,128)}', space=vmem, size = 0x12000, scoped, tag = 'internal scratch']
  %s0 = inlined_call_operand.vmem [shape: f32[2,8,32], index: 0, kind: input, shape index: {}]
  %s1 = inlined_call_operand.vmem [shape: f32[2,8,32], index: 1, kind: input, shape index: {}]
  %s2 = inlined_call_operand.vmem [shape: f32[4,32,16], index: 2, kind: input, shape index: {}]
  %s3 = inlined_call_operand.vmem [shape: f32[4,32,16], index: 3, kind: input, shape index: {}]
  %s4 = inlined_call_operand.vmem [shape: f32[4,32,16], index: 4, kind: input, shape index: {}]
  %s5 = inlined_call_operand.vmem [shape: f32[4,16,32], index: 5, kind: input, shape index: {}]
  %s6 = inlined_call_operand.vmem [shape: f32[1,32], index: 6, kind: input, shape index: {}]
  %s7 = inlined_call_operand.hbm [shape: f32[2,8,32], index: 7, kind: output, shape index: {}]
  %s8 = sld [smem:[#allocation0]]
  $region61: #{tpu_custom_call.1} parent=0
    _
  %s10 = ssub.s32 1, %s8
  %s11 = scalar_select 0, %s10, %s8
  $region1: #{tpu_custom_call.1} parent=0
    #allocation2 [shape = 'u8[8192]{0}', space=vmem, size = 0x2000, scoped, tag = 'output window, operand 0']
    #allocation3 [shape = 's32[2]{0}', space=sflag, size = 0x8, scoped, tag = 'scoped memory for tpu_custom_call.1']
    %12 = vsyncpa [#allocation3], 0
    %s13 = scalar_lea.sflag [#allocation3], 1
    %14 = vsyncpa %s13, 0
    loop: start=0, step=1, limit=4
    $region2: #{tpu_custom_call.1} parent=1 // loop_pre_header
      _
    $region3: #{tpu_custom_call.1} parent=1 // loop_header
      %s16 = sphi 0, %s20
      %p17 = scmp.ge.s32.totalorder %s16, 4
      %s23 = sphi 0, %s35
      %s24 = sphi 0, %s31
      %s25 = sphi 0, %s23
      %s26 = sphi 0, %s24
      %s27 = sphi 0, %s25
      %s28 = sphi 0, %s26
      %s40 = sphi 0, %s42
      %s43 = sphi 0, %s40
      %s44 = sphi 0, %s43
      %s60 = sphi 0, %s44
      %s66 = sphi 0, %s68
      %s69 = sphi 0, %s66
      %s70 = sphi 0, %s69
      %s86 = sphi 0, %s70
      %s90 = sphi 0, %s90
      %s92 = sphi 0, %s90
      %s93 = sphi 0, %s92
      %s107 = sphi 0, %s93
      %s111 = sphi 0, %s111
      %s113 = sphi 0, %s111
      %s114 = sphi 0, %s113
      %s128 = sphi 0, %s114
      %s132 = sphi 0, %s132
      %s134 = sphi 0, %s132
      %s135 = sphi 0, %s134
      %s149 = sphi 0, %s135
      %s153 = sphi 0, %s153
      %s155 = sphi 0, %s153
      %s156 = sphi 0, %s155
      %s170 = sphi 0, %s156
      %s174 = sphi 0, %s174
      %s176 = sphi 0, %s174
      %s177 = sphi 0, %s176
      %s191 = sphi 0, %s177
      %s199 = sphi 0, %s201
      %s202 = sphi 0, %s199
      %s203 = sphi 0, %s202
      %s219 = sphi 0, %s203
    $region4: #{tpu_custom_call.1} parent=1 // loop_header_branch
      %19 = sbr.rel (%p17) target = $region8
    $region5: #{tpu_custom_call.1} parent=1 // loop_body
      %s21 = ssub.s32 %s16, 1
      %s22 = ssub.s32 %s16, 2
      %s29 = sadd.s32 1, %s24
      %p30 = scmp.ge.s32.totalorder %s29, 1
      %s31 = scalar_select %p30, 0, %s29
      %s32 = sadd.s32 1, %s23
      %s33 = scalar_select %p30, %s32, %s23
      %p34 = scmp.ge.s32.totalorder %s33, 2
      %s35 = scalar_select %p34, 0, %s33
      %s36 = ssub.s32 %s23, %s35
      %s37 = ssub.s32 %s24, %s31
      %s38 = sor.u32 %s36, %s37
      %p39 = scmp.eq.s32.totalorder %s38, 0
      %s41 = sadd.s32 %s40, 1
      %s42 = scalar_select %p39, %s40, %s41
      %p45 = pneg %p39
      %p46 = scmp.eq.s32.totalorder %s16, 1
      %p47 = por %p45, %p46
      %p48 = scmp.ne.s32.totalorder %s40, %s43
      %p49 = scmp.eq.s32.totalorder %s16, 0
      %p50 = por %p48, %p49
      %p51 = scmp.ne.s32.totalorder %s40, %s43
      %p52 = scmp.eq.s32.totalorder %s21, 1
      %p53 = por %p51, %p52
      %p54 = scmp.ne.s32.totalorder %s43, %s44
      %p55 = scmp.eq.s32.totalorder %s21, 0
      %p56 = por %p54, %p55
      %p57 = scmp.ne.s32.totalorder %s43, %s44
      %p58 = scmp.eq.s32.totalorder %s22, 1
      %p59 = por %p57, %p58
      %p61 = scmp.ne.s32.totalorder %s44, %s60
      %p62 = scmp.eq.s32.totalorder %s22, 0
      %p63 = por %p61, %p62
      %s64 = ssub.s32 %s23, %s35
      %p65 = scmp.eq.s32.totalorder %s64, 0
      %s67 = sadd.s32 %s66, 1
      %s68 = scalar_select %p65, %s66, %s67
      %p71 = pneg %p65
      %p72 = scmp.eq.s32.totalorder %s16, 1
      %p73 = por %p71, %p72
      %p74 = scmp.ne.s32.totalorder %s66, %s69
      %p75 = scmp.eq.s32.totalorder %s16, 0
      %p76 = por %p74, %p75
      %p77 = scmp.ne.s32.totalorder %s66, %s69
      %p78 = scmp.eq.s32.totalorder %s21, 1
      %p79 = por %p77, %p78
      %p80 = scmp.ne.s32.totalorder %s69, %s70
      %p81 = scmp.eq.s32.totalorder %s21, 0
      %p82 = por %p80, %p81
      %p83 = scmp.ne.s32.totalorder %s69, %s70
      %p84 = scmp.eq.s32.totalorder %s22, 1
      %p85 = por %p83, %p84
      %p87 = scmp.ne.s32.totalorder %s70, %s86
      %p88 = scmp.eq.s32.totalorder %s22, 0
      %p89 = por %p87, %p88
      %s91 = sadd.s32 %s90, 1
      %p94 = scmp.eq.s32.totalorder %s16, 1
      %p95 = scmp.ne.s32.totalorder %s90, %s92
      %p96 = scmp.eq.s32.totalorder %s16, 0
      %p97 = por %p95, %p96
      %p98 = scmp.ne.s32.totalorder %s90, %s92
      %p99 = scmp.eq.s32.totalorder %s21, 1
      %p100 = por %p98, %p99
      %p101 = scmp.ne.s32.totalorder %s92, %s93
      %p102 = scmp.eq.s32.totalorder %s21, 0
      %p103 = por %p101, %p102
      %p104 = scmp.ne.s32.totalorder %s92, %s93
      %p105 = scmp.eq.s32.totalorder %s22, 1
      %p106 = por %p104, %p105
      %p108 = scmp.ne.s32.totalorder %s93, %s107
      %p109 = scmp.eq.s32.totalorder %s22, 0
      %p110 = por %p108, %p109
      %s112 = sadd.s32 %s111, 1
      %p115 = scmp.eq.s32.totalorder %s16, 1
      %p116 = scmp.ne.s32.totalorder %s111, %s113
      %p117 = scmp.eq.s32.totalorder %s16, 0
      %p118 = por %p116, %p117
      %p119 = scmp.ne.s32.totalorder %s111, %s113
      %p120 = scmp.eq.s32.totalorder %s21, 1
      %p121 = por %p119, %p120
      %p122 = scmp.ne.s32.totalorder %s113, %s114
      %p123 = scmp.eq.s32.totalorder %s21, 0
      %p124 = por %p122, %p123
      %p125 = scmp.ne.s32.totalorder %s113, %s114
      %p126 = scmp.eq.s32.totalorder %s22, 1
      %p127 = por %p125, %p126
      %p129 = scmp.ne.s32.totalorder %s114, %s128
      %p130 = scmp.eq.s32.totalorder %s22, 0
      %p131 = por %p129, %p130
      %s133 = sadd.s32 %s132, 1
      %p136 = scmp.eq.s32.totalorder %s16, 1
      %p137 = scmp.ne.s32.totalorder %s132, %s134
      %p138 = scmp.eq.s32.totalorder %s16, 0
      %p139 = por %p137, %p138
      %p140 = scmp.ne.s32.totalorder %s132, %s134
      %p141 = scmp.eq.s32.totalorder %s21, 1
      %p142 = por %p140, %p141
      %p143 = scmp.ne.s32.totalorder %s134, %s135
      %p144 = scmp.eq.s32.totalorder %s21, 0
      %p145 = por %p143, %p144
      %p146 = scmp.ne.s32.totalorder %s134, %s135
      %p147 = scmp.eq.s32.totalorder %s22, 1
      %p148 = por %p146, %p147
      %p150 = scmp.ne.s32.totalorder %s135, %s149
      %p151 = scmp.eq.s32.totalorder %s22, 0
      %p152 = por %p150, %p151
      %s154 = sadd.s32 %s153, 1
      %p157 = scmp.eq.s32.totalorder %s16, 1
      %p158 = scmp.ne.s32.totalorder %s153, %s155
      %p159 = scmp.eq.s32.totalorder %s16, 0
      %p160 = por %p158, %p159
      %p161 = scmp.ne.s32.totalorder %s153, %s155
      %p162 = scmp.eq.s32.totalorder %s21, 1
      %p163 = por %p161, %p162
      %p164 = scmp.ne.s32.totalorder %s155, %s156
      %p165 = scmp.eq.s32.totalorder %s21, 0
      %p166 = por %p164, %p165
      %p167 = scmp.ne.s32.totalorder %s155, %s156
      %p168 = scmp.eq.s32.totalorder %s22, 1
      %p169 = por %p167, %p168
      %p171 = scmp.ne.s32.totalorder %s156, %s170
      %p172 = scmp.eq.s32.totalorder %s22, 0
      %p173 = por %p171, %p172
      %s175 = sadd.s32 %s174, 1
      %p178 = scmp.eq.s32.totalorder %s16, 1
      %p179 = scmp.ne.s32.totalorder %s174, %s176
      %p180 = scmp.eq.s32.totalorder %s16, 0
      %p181 = por %p179, %p180
      %p182 = scmp.ne.s32.totalorder %s174, %s176
      %p183 = scmp.eq.s32.totalorder %s21, 1
      %p184 = por %p182, %p183
      %p185 = scmp.ne.s32.totalorder %s176, %s177
      %p186 = scmp.eq.s32.totalorder %s21, 0
      %p187 = por %p185, %p186
      %p188 = scmp.ne.s32.totalorder %s176, %s177
      %p189 = scmp.eq.s32.totalorder %s22, 1
      %p190 = por %p188, %p189
      %p192 = scmp.ne.s32.totalorder %s177, %s191
      %p193 = scmp.eq.s32.totalorder %s22, 0
      %p194 = por %p192, %p193
      %s195 = ssub.s32 %s23, %s35
      %s196 = ssub.s32 %s24, %s31
      %s197 = sor.u32 %s195, %s196
      %p198 = scmp.eq.s32.totalorder %s197, 0
      %s200 = sadd.s32 %s199, 1
      %s201 = scalar_select %p198, %s199, %s200
      %p204 = pneg %p198
      %p205 = scmp.eq.s32.totalorder %s16, 1
      %p206 = por %p204, %p205
      %p207 = scmp.ne.s32.totalorder %s199, %s202
      %p208 = scmp.eq.s32.totalorder %s16, 0
      %p209 = por %p207, %p208
      %p210 = scmp.ne.s32.totalorder %s199, %s202
      %p211 = scmp.eq.s32.totalorder %s21, 1
      %p212 = por %p210, %p211
      %p213 = scmp.ne.s32.totalorder %s202, %s203
      %p214 = scmp.eq.s32.totalorder %s21, 0
      %p215 = por %p213, %p214
      %p216 = scmp.ne.s32.totalorder %s202, %s203
      %p217 = scmp.eq.s32.totalorder %s22, 1
      %p218 = por %p216, %p217
      %p220 = scmp.ne.s32.totalorder %s203, %s219
      %p221 = scmp.eq.s32.totalorder %s22, 0
      %p222 = por %p220, %p221
      %p223 = scmp.le.s32.totalorder 1, %s16
      %p224 = scmp.lt.s32.totalorder %s16, 3
      %p225 = pnand %p223, %p224
      %p226 = pneg %p225
      // Predicated region
      $region9: #{tpu_custom_call.1} parent=5 // pred_check
        _
      $region10: #{tpu_custom_call.1} parent=5 // pred_check_branch
        %228 = sbr.rel (%p225) target = $region12
      $region11: #{tpu_custom_call.1} parent=5 // pred_region
        %s229 = ssub.s32 %s16, 1
        // Predicated region
        $region13: #{tpu_custom_call.1} parent=11 // pred_check
          %p230 = pneg %p103
        $region14: #{tpu_custom_call.1} parent=11 // pred_check_branch
          %232 = sbr.rel (%p230) target = $region16
        $region15: #{tpu_custom_call.1} parent=11 // pred_region
          _
        $region16: #{tpu_custom_call.1} parent=11 // pred_fallthru
          _
        // Predicated region
        $region17: #{tpu_custom_call.1} parent=11 // pred_check
          %p233 = pneg %p124
        $region18: #{tpu_custom_call.1} parent=11 // pred_check_branch
          %235 = sbr.rel (%p233) target = $region20
        $region19: #{tpu_custom_call.1} parent=11 // pred_region
          _
        $region20: #{tpu_custom_call.1} parent=11 // pred_fallthru
          _
        // Predicated region
        $region21: #{tpu_custom_call.1} parent=11 // pred_check
          %p236 = pneg %p145
        $region22: #{tpu_custom_call.1} parent=11 // pred_check_branch
          %238 = sbr.rel (%p236) target = $region24
        $region23: #{tpu_custom_call.1} parent=11 // pred_region
          _
        $region24: #{tpu_custom_call.1} parent=11 // pred_fallthru
          _
        // Predicated region
        $region25: #{tpu_custom_call.1} parent=11 // pred_check
          %p239 = pneg %p166
        $region26: #{tpu_custom_call.1} parent=11 // pred_check_branch
          %241 = sbr.rel (%p239) target = $region28
        $region27: #{tpu_custom_call.1} parent=11 // pred_region
          _
        $region28: #{tpu_custom_call.1} parent=11 // pred_fallthru
          _
        // Predicated region
        $region29: #{tpu_custom_call.1} parent=11 // pred_check
          %p242 = pneg %p187
        $region30: #{tpu_custom_call.1} parent=11 // pred_check_branch
          %244 = sbr.rel (%p242) target = $region32
        $region31: #{tpu_custom_call.1} parent=11 // pred_region
          _
        $region32: #{tpu_custom_call.1} parent=11 // pred_fallthru
          _
      $region12: #{tpu_custom_call.1} parent=5 // pred_fallthru
        _
      %p245 = scmp.lt.s32.totalorder %s16, 2
      // Predicated region
      $region33: #{tpu_custom_call.1} parent=5 // pred_check
        %p246 = pneg %p245
      $region34: #{tpu_custom_call.1} parent=5 // pred_check_branch
        %248 = sbr.rel (%p246) target = $region36
      $region35: #{tpu_custom_call.1} parent=5 // pred_region
        // Predicated region
        $region37: #{tpu_custom_call.1} parent=35 // pred_check
          %p249 = pneg %p50
        $region38: #{tpu_custom_call.1} parent=35 // pred_check_branch
          %251 = sbr.rel (%p249) target = $region40
        $region39: #{tpu_custom_call.1} parent=35 // pred_region
          %p252 = scmp.lt.s32.totalorder %s23, 1
          %s253 = scalar_select %p252, %s23, 1
          %p254 = scmp.lt.s32.totalorder %s24, 0
          %s255 = scalar_select %p254, %s24, 0
          %s256 = sadd.s32 %s255, %s253
          %s257 = smul.addr %s256, 8
          %s258 = scalar_lea.vmem %s0, %s257
        $region40: #{tpu_custom_call.1} parent=35 // pred_fallthru
          _
        // Predicated region
        $region41: #{tpu_custom_call.1} parent=35 // pred_check
          %p259 = pneg %p76
        $region42: #{tpu_custom_call.1} parent=35 // pred_check_branch
          %261 = sbr.rel (%p259) target = $region44
        $region43: #{tpu_custom_call.1} parent=35 // pred_region
          %p262 = scmp.lt.s32.totalorder %s23, 1
          %s263 = scalar_select %p262, %s23, 1
          %s264 = smul.addr %s263, 8
          %s265 = scalar_lea.vmem %s1, %s264
        $region44: #{tpu_custom_call.1} parent=35 // pred_fallthru
          _
      $region36: #{tpu_custom_call.1} parent=5 // pred_fallthru
        _
      %p266 = scmp.le.s32.totalorder 1, %s16
      %p267 = scmp.lt.s32.totalorder %s16, 3
      %p268 = pnand %p266, %p267
      %p269 = pneg %p268
      // Predicated region
      $region45: #{tpu_custom_call.1} parent=5 // pred_check
        _
      $region46: #{tpu_custom_call.1} parent=5 // pred_check_branch
        %271 = sbr.rel (%p268) target = $region48
      $region47: #{tpu_custom_call.1} parent=5 // pred_region
        %s272 = ssub.s32 %s16, 1
        %p273 = scmp.lt.s32.totalorder %s25, 1
        %s274 = scalar_select %p273, %s25, 1
        %p275 = scmp.lt.s32.totalorder %s26, 0
        %s276 = scalar_select %p275, %s26, 0
        %s277 = sadd.s32 %s276, %s274
        %s278 = smul.addr %s277, 8
        %s279 = scalar_lea.vmem %s0, %s278
        %p280 = pneg %p56
        %p281 = pneg %p53
        %p282 = scmp.lt.s32.totalorder %s25, 1
        %s283 = scalar_select %p282, %s25, 1
        %s284 = smul.addr %s283, 8
        %s285 = scalar_lea.vmem %s1, %s284
        %p286 = pneg %p82
        %p287 = pneg %p79
        %p288 = pneg %p103
        %p289 = pneg %p100
        %p290 = pneg %p124
        %p291 = pneg %p121
        %p292 = pneg %p145
        %p293 = pneg %p142
        %p294 = pneg %p166
        %p295 = pneg %p163
        %p296 = pneg %p187
        %p297 = pneg %p184
        %p298 = pneg %p215
        %p299 = pneg %p212
        %s300 = sand.u32 %s202, 1
        %s301 = scalar_lea.sflag [#allocation3], %s300
        %s302 = sand.u32 %s202, 1
        %s303 = smul.addr %s302, 8
        %s304 = scalar_lea.vmem [#allocation2], %s303
        %p305 = scmp.lt.s32.totalorder %s25, 1
        %s306 = scalar_select %p305, %s25, 1
        %p307 = scmp.lt.s32.totalorder %s26, 0
        %s308 = scalar_select %p307, %s26, 0
        %s309 = sadd.s32 %s308, %s306
        %s310 = smul.addr %s309, 8
        %s311 = scalar_lea.vmem %s0, %s310
        %p312 = scmp.lt.s32.totalorder %s25, 1
        %s313 = scalar_select %p312, %s25, 1
        %s314 = smul.addr %s313, 8
        %s315 = scalar_lea.vmem %s1, %s314
        %v316 = vld [vmem:[%s311] sm:$0xff]
        %v317 = vld [vmem:[%s315] sm:$0xff]
        %v318 = vld [vmem:[%s2] sm:$0xff]
        %v319 = vld [vmem:[%s2 + $0x8] sm:$0xff]
        %v320 = vld [vmem:[%s2 + $0x10] sm:$0xff]
        %v321 = vld [vmem:[%s2 + $0x18] sm:$0xff]
        %v322 = vld [vmem:[%s2 + $0x20] sm:$0xff]
        %v323 = vld [vmem:[%s2 + $0x28] sm:$0xff]
        %v324 = vld [vmem:[%s2 + $0x30] sm:$0xff]
        %v325 = vld [vmem:[%s2 + $0x38] sm:$0xff]
        %v326 = vld [vmem:[%s2 + $0x40] sm:$0xff]
        %v327 = vld [vmem:[%s2 + $0x48] sm:$0xff]
        %v328 = vld [vmem:[%s2 + $0x50] sm:$0xff]
        %v329 = vld [vmem:[%s2 + $0x58] sm:$0xff]
        %v330 = vld [vmem:[%s2 + $0x60] sm:$0xff]
        %v331 = vld [vmem:[%s2 + $0x68] sm:$0xff]
        %v332 = vld [vmem:[%s2 + $0x70] sm:$0xff]
        %v333 = vld [vmem:[%s2 + $0x78] sm:$0xff]
        %vm334 = vcmask 261120
        %v336 = vsel %vm334, %v316, 0
        %338 = vmatprep.subr.mxu0 0.0
        %339 = vmatpush1.msra.mxu0 %v318
        %340 = vmatprep.subr.mxu0 0.0
        %341 = vmatpush1.msra.mxu0 %v319
        %342 = vmatprep.subr.mxu0 0.0
        %343 = vmatpush1.msra.mxu0 %v320
        %344 = vmatprep.subr.mxu0 0.0
        %345 = vmatpush1.msra.mxu0 %v321
        %346 = vmatprep.subr.mxu0 0.0
        %347 = vmatpush1.msra.mxu0 0.0
        %348 = vmatprep.subr.mxu0 0.0
        %349 = vmatpush1.msra.mxu0 0.0
        %350 = vmatprep.subr.mxu0 0.0
        %351 = vmatpush1.msra.mxu0 0.0
        %352 = vmatprep.subr.mxu0 0.0
        %353 = vmatpush1.msra.mxu0 0.0
        %354 = vmatprep.subr.mxu0 0.0
        %355 = vmatpush1.msra.mxu0 0.0
        %356 = vmatprep.subr.mxu0 0.0
        %357 = vmatpush1.msra.mxu0 0.0
        %358 = vmatprep.subr.mxu0 0.0
        %359 = vmatpush1.msra.mxu0 0.0
        %360 = vmatprep.subr.mxu0 0.0
        %361 = vmatpush1.msra.mxu0 0.0
        %362 = vmatprep.subr.mxu0 0.0
        %363 = vmatpush1.msra.mxu0 0.0
        %364 = vmatprep.subr.mxu0 0.0
        %365 = vmatpush1.msra.mxu0 0.0
        %366 = vmatprep.subr.mxu0 0.0
        %367 = vmatpush1.msra.mxu0 0.0
        %368 = vmatprep.subr.mxu0 0.0
        %369 = vmatpush1.msra.mxu0 0.0
        %370 = vmatprep.subr.mxu0 0.0
        %371 = vmatpush1.msra.mxu0 0.0
        %372 = vmatprep.subr.mxu0 0.0
        %373 = vmatpush1.msra.mxu0 0.0
        %374 = vmatprep.subr.mxu0 0.0
        %375 = vmatpush1.msra.mxu0 0.0
        %376 = vmatprep.subr.mxu0 0.0
        %377 = vmatpush1.msra.mxu0 0.0
        %378 = vmatprep.subr.mxu0 0.0
        %379 = vmatpush1.msra.mxu0 0.0
        %380 = vmatprep.subr.mxu0 0.0
        %381 = vmatpush1.msra.mxu0 0.0
        %382 = vmatprep.subr.mxu0 0.0
        %383 = vmatpush1.msra.mxu0 0.0
        %384 = vmatprep.subr.mxu0 0.0
        %385 = vmatpush1.msra.mxu0 0.0
        %386 = vmatprep.subr.mxu0 0.0
        %387 = vmatpush1.msra.mxu0 0.0
        %388 = vmatprep.subr.mxu0 0.0
        %389 = vmatpush1.msra.mxu0 0.0
        %390 = vmatprep.subr.mxu0 0.0
        %391 = vmatpush1.msra.mxu0 0.0
        %392 = vmatprep.subr.mxu0 0.0
        %393 = vmatpush1.msra.mxu0 0.0
        %394 = vmatprep.subr.mxu0 0.0
        %395 = vmatpush1.msra.mxu0 0.0
        %396 = vmatprep.subr.mxu0 0.0
        %397 = vmatpush1.msra.mxu0 0.0
        %398 = vmatprep.subr.mxu0 0.0
        %399 = vmatpush1.msra.mxu0 0.0
        %400 = vmatprep.subr.mxu0 0.0
        %401 = vmatpush1.msra.mxu0 0.0
        %402 = vmatprep.mubr.f32.mxu0 0.0
        %403 = vmatmul.mubr.f32.gmra.mrb[0].mxu0 %v336
        %v404 = vpop.f32.mrb[0].mxu0
        %v405 = vadd.f32 0.0, %v404
        %v406 = vpop.f32.mrb[0].mxu0
        %407 = vdwg.mxu0
        %408 = vmatprep.subr.mxu0 0.0
        %409 = vmatpush1.msra.mxu0 %v322
        %410 = vmatprep.subr.mxu0 0.0
        %411 = vmatpush1.msra.mxu0 %v323
        %412 = vmatprep.subr.mxu0 0.0
        %413 = vmatpush1.msra.mxu0 %v324
        %414 = vmatprep.subr.mxu0 0.0
        %415 = vmatpush1.msra.mxu0 %v325
        %416 = vmatprep.subr.mxu0 0.0
        %417 = vmatpush1.msra.mxu0 0.0
        %418 = vmatprep.subr.mxu0 0.0
        %419 = vmatpush1.msra.mxu0 0.0
        %420 = vmatprep.subr.mxu0 0.0
        %421 = vmatpush1.msra.mxu0 0.0
        %422 = vmatprep.subr.mxu0 0.0
        %423 = vmatpush1.msra.mxu0 0.0
        %424 = vmatprep.subr.mxu0 0.0
        %425 = vmatpush1.msra.mxu0 0.0
        %426 = vmatprep.subr.mxu0 0.0
        %427 = vmatpush1.msra.mxu0 0.0
        %428 = vmatprep.subr.mxu0 0.0
        %429 = vmatpush1.msra.mxu0 0.0
        %430 = vmatprep.subr.mxu0 0.0
        %431 = vmatpush1.msra.mxu0 0.0
        %432 = vmatprep.subr.mxu0 0.0
        %433 = vmatpush1.msra.mxu0 0.0
        %434 = vmatprep.subr.mxu0 0.0
        %435 = vmatpush1.msra.mxu0 0.0
        %436 = vmatprep.subr.mxu0 0.0
        %437 = vmatpush1.msra.mxu0 0.0
        %438 = vmatprep.subr.mxu0 0.0
        %439 = vmatpush1.msra.mxu0 0.0
        %440 = vmatprep.subr.mxu0 0.0
        %441 = vmatpush1.msra.mxu0 0.0
        %442 = vmatprep.subr.mxu0 0.0
        %443 = vmatpush1.msra.mxu0 0.0
        %444 = vmatprep.subr.mxu0 0.0
        %445 = vmatpush1.msra.mxu0 0.0
        %446 = vmatprep.subr.mxu0 0.0
        %447 = vmatpush1.msra.mxu0 0.0
        %448 = vmatprep.subr.mxu0 0.0
        %449 = vmatpush1.msra.mxu0 0.0
        %450 = vmatprep.subr.mxu0 0.0
        %451 = vmatpush1.msra.mxu0 0.0
        %452 = vmatprep.subr.mxu0 0.0
        %453 = vmatpush1.msra.mxu0 0.0
        %454 = vmatprep.subr.mxu0 0.0
        %455 = vmatpush1.msra.mxu0 0.0
        %456 = vmatprep.subr.mxu0 0.0
        %457 = vmatpush1.msra.mxu0 0.0
        %458 = vmatprep.subr.mxu0 0.0
        %459 = vmatpush1.msra.mxu0 0.0
        %460 = vmatprep.subr.mxu0 0.0
        %461 = vmatpush1.msra.mxu0 0.0
        %462 = vmatprep.subr.mxu0 0.0
        %463 = vmatpush1.msra.mxu0 0.0
        %464 = vmatprep.subr.mxu0 0.0
        %465 = vmatpush1.msra.mxu0 0.0
        %466 = vmatprep.subr.mxu0 0.0
        %467 = vmatpush1.msra.mxu0 0.0
        %468 = vmatprep.subr.mxu0 0.0
        %469 = vmatpush1.msra.mxu0 0.0
        %470 = vmatprep.subr.mxu0 0.0
        %471 = vmatpush1.msra.mxu0 0.0
        %472 = vmatprep.mubr.f32.mxu0 0.0
        %473 = vmatmul.mubr.f32.gmra.mrb[0].mxu0 %v336
        %v474 = vpop.f32.mrb[0].mxu0
        %v475 = vadd.f32 0.0, %v474
        %v476 = vpop.f32.mrb[0].mxu0
        %477 = vdwg.mxu0
        %478 = vmatprep.subr.mxu0 0.0
        %479 = vmatpush1.msra.mxu0 %v326
        %480 = vmatprep.subr.mxu0 0.0
        %481 = vmatpush1.msra.mxu0 %v327
        %482 = vmatprep.subr.mxu0 0.0
        %483 = vmatpush1.msra.mxu0 %v328
        %484 = vmatprep.subr.mxu0 0.0
        %485 = vmatpush1.msra.mxu0 %v329
        %486 = vmatprep.subr.mxu0 0.0
        %487 = vmatpush1.msra.mxu0 0.0
        %488 = vmatprep.subr.mxu0 0.0
        %489 = vmatpush1.msra.mxu0 0.0
        %490 = vmatprep.subr.mxu0 0.0
        %491 = vmatpush1.msra.mxu0 0.0
        %492 = vmatprep.subr.mxu0 0.0
        %493 = vmatpush1.msra.mxu0 0.0
        %494 = vmatprep.subr.mxu0 0.0
        %495 = vmatpush1.msra.mxu0 0.0
        %496 = vmatprep.subr.mxu0 0.0
        %497 = vmatpush1.msra.mxu0 0.0
        %498 = vmatprep.subr.mxu0 0.0
        %499 = vmatpush1.msra.mxu0 0.0
        %500 = vmatprep.subr.mxu0 0.0
        %501 = vmatpush1.msra.mxu0 0.0
        %502 = vmatprep.subr.mxu0 0.0
        %503 = vmatpush1.msra.mxu0 0.0
        %504 = vmatprep.subr.mxu0 0.0
        %505 = vmatpush1.msra.mxu0 0.0
        %506 = vmatprep.subr.mxu0 0.0
        %507 = vmatpush1.msra.mxu0 0.0
        %508 = vmatprep.subr.mxu0 0.0
        %509 = vmatpush1.msra.mxu0 0.0
        %510 = vmatprep.subr.mxu0 0.0
        %511 = vmatpush1.msra.mxu0 0.0
        %512 = vmatprep.subr.mxu0 0.0
        %513 = vmatpush1.msra.mxu0 0.0
        %514 = vmatprep.subr.mxu0 0.0
        %515 = vmatpush1.msra.mxu0 0.0
        %516 = vmatprep.subr.mxu0 0.0
        %517 = vmatpush1.msra.mxu0 0.0
        %518 = vmatprep.subr.mxu0 0.0
        %519 = vmatpush1.msra.mxu0 0.0
        %520 = vmatprep.subr.mxu0 0.0
        %521 = vmatpush1.msra.mxu0 0.0
        %522 = vmatprep.subr.mxu0 0.0
        %523 = vmatpush1.msra.mxu0 0.0
        %524 = vmatprep.subr.mxu0 0.0
        %525 = vmatpush1.msra.mxu0 0.0
        %526 = vmatprep.subr.mxu0 0.0
        %527 = vmatpush1.msra.mxu0 0.0
        %528 = vmatprep.subr.mxu0 0.0
        %529 = vmatpush1.msra.mxu0 0.0
        %530 = vmatprep.subr.mxu0 0.0
        %531 = vmatpush1.msra.mxu0 0.0
        %532 = vmatprep.subr.mxu0 0.0
        %533 = vmatpush1.msra.mxu0 0.0
        %534 = vmatprep.subr.mxu0 0.0
        %535 = vmatpush1.msra.mxu0 0.0
        %536 = vmatprep.subr.mxu0 0.0
        %537 = vmatpush1.msra.mxu0 0.0
        %538 = vmatprep.subr.mxu0 0.0
        %539 = vmatpush1.msra.mxu0 0.0
        %540 = vmatprep.subr.mxu0 0.0
        %541 = vmatpush1.msra.mxu0 0.0
        %542 = vmatprep.mubr.f32.mxu0 0.0
        %543 = vmatmul.mubr.f32.gmra.mrb[0].mxu0 %v336
        %v544 = vpop.f32.mrb[0].mxu0
        %v545 = vadd.f32 0.0, %v544
        %v546 = vpop.f32.mrb[0].mxu0
        %547 = vdwg.mxu0
        %548 = vmatprep.subr.mxu0 0.0
        %549 = vmatpush1.msra.mxu0 %v330
        %550 = vmatprep.subr.mxu0 0.0
        %551 = vmatpush1.msra.mxu0 %v331
        %552 = vmatprep.subr.mxu0 0.0
        %553 = vmatpush1.msra.mxu0 %v332
        %554 = vmatprep.subr.mxu0 0.0
        %555 = vmatpush1.msra.mxu0 %v333
        %556 = vmatprep.subr.mxu0 0.0
        %557 = vmatpush1.msra.mxu0 0.0
        %558 = vmatprep.subr.mxu0 0.0
        %559 = vmatpush1.msra.mxu0 0.0
        %560 = vmatprep.subr.mxu0 0.0
        %561 = vmatpush1.msra.mxu0 0.0
        %562 = vmatprep.subr.mxu0 0.0
        %563 = vmatpush1.msra.mxu0 0.0
        %564 = vmatprep.subr.mxu0 0.0
        %565 = vmatpush1.msra.mxu0 0.0
        %566 = vmatprep.subr.mxu0 0.0
        %567 = vmatpush1.msra.mxu0 0.0
        %568 = vmatprep.subr.mxu0 0.0
        %569 = vmatpush1.msra.mxu0 0.0
        %570 = vmatprep.subr.mxu0 0.0
        %571 = vmatpush1.msra.mxu0 0.0
        %572 = vmatprep.subr.mxu0 0.0
        %573 = vmatpush1.msra.mxu0 0.0
        %574 = vmatprep.subr.mxu0 0.0
        %575 = vmatpush1.msra.mxu0 0.0
        %576 = vmatprep.subr.mxu0 0.0
        %577 = vmatpush1.msra.mxu0 0.0
        %578 = vmatprep.subr.mxu0 0.0
        %579 = vmatpush1.msra.mxu0 0.0
        %580 = vmatprep.subr.mxu0 0.0
        %581 = vmatpush1.msra.mxu0 0.0
        %582 = vmatprep.subr.mxu0 0.0
        %583 = vmatpush1.msra.mxu0 0.0
        %584 = vmatprep.subr.mxu0 0.0
        %585 = vmatpush1.msra.mxu0 0.0
        %586 = vmatprep.subr.mxu0 0.0
        %587 = vmatpush1.msra.mxu0 0.0
        %588 = vmatprep.subr.mxu0 0.0
        %589 = vmatpush1.msra.mxu0 0.0
        %590 = vmatprep.subr.mxu0 0.0
        %591 = vmatpush1.msra.mxu0 0.0
        %592 = vmatprep.subr.mxu0 0.0
        %593 = vmatpush1.msra.mxu0 0.0
        %594 = vmatprep.subr.mxu0 0.0
        %595 = vmatpush1.msra.mxu0 0.0
        %596 = vmatprep.subr.mxu0 0.0
        %597 = vmatpush1.msra.mxu0 0.0
        %598 = vmatprep.subr.mxu0 0.0
        %599 = vmatpush1.msra.mxu0 0.0
        %600 = vmatprep.subr.mxu0 0.0
        %601 = vmatpush1.msra.mxu0 0.0
        %602 = vmatprep.subr.mxu0 0.0
        %603 = vmatpush1.msra.mxu0 0.0
        %604 = vmatprep.subr.mxu0 0.0
        %605 = vmatpush1.msra.mxu0 0.0
        %606 = vmatprep.subr.mxu0 0.0
        %607 = vmatpush1.msra.mxu0 0.0
        %608 = vmatprep.subr.mxu0 0.0
        %609 = vmatpush1.msra.mxu0 0.0
        %610 = vmatprep.subr.mxu0 0.0
        %611 = vmatpush1.msra.mxu0 0.0
        %612 = vmatprep.mubr.f32.mxu0 0.0
        %613 = vmatmul.mubr.f32.gmra.mrb[0].mxu0 %v336
        %v614 = vpop.f32.mrb[0].mxu0
        %v615 = vadd.f32 0.0, %v614
        %v616 = vpop.f32.mrb[0].mxu0
        %617 = vdwg.mxu0
        %v618 = vld [vmem:[%s3] sm:$0xff]
        %v619 = vld [vmem:[%s3 + $0x8] sm:$0xff]
        %v620 = vld [vmem:[%s3 + $0x10] sm:$0xff]
        %v621 = vld [vmem:[%s3 + $0x18] sm:$0xff]
        %v622 = vld [vmem:[%s3 + $0x20] sm:$0xff]
        %v623 = vld [vmem:[%s3 + $0x28] sm:$0xff]
        %v624 = vld [vmem:[%s3 + $0x30] sm:$0xff]
        %v625 = vld [vmem:[%s3 + $0x38] sm:$0xff]
        %v626 = vld [vmem:[%s3 + $0x40] sm:$0xff]
        %v627 = vld [vmem:[%s3 + $0x48] sm:$0xff]
        %v628 = vld [vmem:[%s3 + $0x50] sm:$0xff]
        %v629 = vld [vmem:[%s3 + $0x58] sm:$0xff]
        %v630 = vld [vmem:[%s3 + $0x60] sm:$0xff]
        %v631 = vld [vmem:[%s3 + $0x68] sm:$0xff]
        %v632 = vld [vmem:[%s3 + $0x70] sm:$0xff]
        %v633 = vld [vmem:[%s3 + $0x78] sm:$0xff]
        %v635 = vsel %vm334, %v317, 0
        %637 = vmatprep.subr.mxu0 0.0
        %638 = vmatpush1.msra.mxu0 %v618
        %639 = vmatprep.subr.mxu0 0.0
        %640 = vmatpush1.msra.mxu0 %v619
        %641 = vmatprep.subr.mxu0 0.0
        %642 = vmatpush1.msra.mxu0 %v620
        %643 = vmatprep.subr.mxu0 0.0
        %644 = vmatpush1.msra.mxu0 %v621
        %645 = vmatprep.subr.mxu0 0.0
        %646 = vmatpush1.msra.mxu0 0.0
        %647 = vmatprep.subr.mxu0 0.0
        %648 = vmatpush1.msra.mxu0 0.0
        %649 = vmatprep.subr.mxu0 0.0
        %650 = vmatpush1.msra.mxu0 0.0
        %651 = vmatprep.subr.mxu0 0.0
        %652 = vmatpush1.msra.mxu0 0.0
        %653 = vmatprep.subr.mxu0 0.0
        %654 = vmatpush1.msra.mxu0 0.0
        %655 = vmatprep.subr.mxu0 0.0
        %656 = vmatpush1.msra.mxu0 0.0
        %657 = vmatprep.subr.mxu0 0.0
        %658 = vmatpush1.msra.mxu0 0.0
        %659 = vmatprep.subr.mxu0 0.0
        %660 = vmatpush1.msra.mxu0 0.0
        %661 = vmatprep.subr.mxu0 0.0
        %662 = vmatpush1.msra.mxu0 0.0
        %663 = vmatprep.subr.mxu0 0.0
        %664 = vmatpush1.msra.mxu0 0.0
        %665 = vmatprep.subr.mxu0 0.0
        %666 = vmatpush1.msra.mxu0 0.0
        %667 = vmatprep.subr.mxu0 0.0
        %668 = vmatpush1.msra.mxu0 0.0
        %669 = vmatprep.subr.mxu0 0.0
        %670 = vmatpush1.msra.mxu0 0.0
        %671 = vmatprep.subr.mxu0 0.0
        %672 = vmatpush1.msra.mxu0 0.0
        %673 = vmatprep.subr.mxu0 0.0
        %674 = vmatpush1.msra.mxu0 0.0
        %675 = vmatprep.subr.mxu0 0.0
        %676 = vmatpush1.msra.mxu0 0.0
        %677 = vmatprep.subr.mxu0 0.0
        %678 = vmatpush1.msra.mxu0 0.0
        %679 = vmatprep.subr.mxu0 0.0
        %680 = vmatpush1.msra.mxu0 0.0
        %681 = vmatprep.subr.mxu0 0.0
        %682 = vmatpush1.msra.mxu0 0.0
        %683 = vmatprep.subr.mxu0 0.0
        %684 = vmatpush1.msra.mxu0 0.0
        %685 = vmatprep.subr.mxu0 0.0
        %686 = vmatpush1.msra.mxu0 0.0
        %687 = vmatprep.subr.mxu0 0.0
        %688 = vmatpush1.msra.mxu0 0.0
        %689 = vmatprep.subr.mxu0 0.0
        %690 = vmatpush1.msra.mxu0 0.0
        %691 = vmatprep.subr.mxu0 0.0
        %692 = vmatpush1.msra.mxu0 0.0
        %693 = vmatprep.subr.mxu0 0.0
        %694 = vmatpush1.msra.mxu0 0.0
        %695 = vmatprep.subr.mxu0 0.0
        %696 = vmatpush1.msra.mxu0 0.0
        %697 = vmatprep.subr.mxu0 0.0
        %698 = vmatpush1.msra.mxu0 0.0
        %699 = vmatprep.subr.mxu0 0.0
        %700 = vmatpush1.msra.mxu0 0.0
        %701 = vmatprep.mubr.f32.mxu0 0.0
        %702 = vmatmul.mubr.f32.gmra.mrb[0].mxu0 %v635
        %v703 = vpop.f32.mrb[0].mxu0
        %v704 = vadd.f32 0.0, %v703
        %v705 = vpop.f32.mrb[0].mxu0
        %706 = vdwg.mxu0
        %707 = vmatprep.subr.mxu0 0.0
        %708 = vmatpush1.msra.mxu0 %v622
        %709 = vmatprep.subr.mxu0 0.0
        %710 = vmatpush1.msra.mxu0 %v623
        %711 = vmatprep.subr.mxu0 0.0
        %712 = vmatpush1.msra.mxu0 %v624
        %713 = vmatprep.subr.mxu0 0.0
        %714 = vmatpush1.msra.mxu0 %v625
        %715 = vmatprep.subr.mxu0 0.0
        %716 = vmatpush1.msra.mxu0 0.0
        %717 = vmatprep.subr.mxu0 0.0
        %718 = vmatpush1.msra.mxu0 0.0
        %719 = vmatprep.subr.mxu0 0.0
        %720 = vmatpush1.msra.mxu0 0.0
        %721 = vmatprep.subr.mxu0 0.0
        %722 = vmatpush1.msra.mxu0 0.0
        %723 = vmatprep.subr.mxu0 0.0
        %724 = vmatpush1.msra.mxu0 0.0
        %725 = vmatprep.subr.mxu0 0.0
        %726 = vmatpush1.msra.mxu0 0.0
        %727 = vmatprep.subr.mxu0 0.0
        %728 = vmatpush1.msra.mxu0 0.0
        %729 = vmatprep.subr.mxu0 0.0
        %730 = vmatpush1.msra.mxu0 0.0
        %731 = vmatprep.subr.mxu0 0.0
        %732 = vmatpush1.msra.mxu0 0.0
        %733 = vmatprep.subr.mxu0 0.0
        %734 = vmatpush1.msra.mxu0 0.0
        %735 = vmatprep.subr.mxu0 0.0
        %736 = vmatpush1.msra.mxu0 0.0
        %737 = vmatprep.subr.mxu0 0.0
        %738 = vmatpush1.msra.mxu0 0.0
        %739 = vmatprep.subr.mxu0 0.0
        %740 = vmatpush1.msra.mxu0 0.0
        %741 = vmatprep.subr.mxu0 0.0
        %742 = vmatpush1.msra.mxu0 0.0
        %743 = vmatprep.subr.mxu0 0.0
        %744 = vmatpush1.msra.mxu0 0.0
        %745 = vmatprep.subr.mxu0 0.0
        %746 = vmatpush1.msra.mxu0 0.0
        %747 = vmatprep.subr.mxu0 0.0
        %748 = vmatpush1.msra.mxu0 0.0
        %749 = vmatprep.subr.mxu0 0.0
        %750 = vmatpush1.msra.mxu0 0.0
        %751 = vmatprep.subr.mxu0 0.0
        %752 = vmatpush1.msra.mxu0 0.0
        %753 = vmatprep.subr.mxu0 0.0
        %754 = vmatpush1.msra.mxu0 0.0
        %755 = vmatprep.subr.mxu0 0.0
        %756 = vmatpush1.msra.mxu0 0.0
        %757 = vmatprep.subr.mxu0 0.0
        %758 = vmatpush1.msra.mxu0 0.0
        %759 = vmatprep.subr.mxu0 0.0
        %760 = vmatpush1.msra.mxu0 0.0
        %761 = vmatprep.subr.mxu0 0.0
        %762 = vmatpush1.msra.mxu0 0.0
        %763 = vmatprep.subr.mxu0 0.0
        %764 = vmatpush1.msra.mxu0 0.0
        %765 = vmatprep.subr.mxu0 0.0
        %766 = vmatpush1.msra.mxu0 0.0
        %767 = vmatprep.subr.mxu0 0.0
        %768 = vmatpush1.msra.mxu0 0.0
        %769 = vmatprep.subr.mxu0 0.0
        %770 = vmatpush1.msra.mxu0 0.0
        %771 = vmatprep.mubr.f32.mxu0 0.0
        %772 = vmatmul.mubr.f32.gmra.mrb[0].mxu0 %v635
        %v773 = vpop.f32.mrb[0].mxu0
        %v774 = vadd.f32 0.0, %v773
        %v775 = vpop.f32.mrb[0].mxu0
        %776 = vdwg.mxu0
        %777 = vmatprep.subr.mxu0 0.0
        %778 = vmatpush1.msra.mxu0 %v626
        %779 = vmatprep.subr.mxu0 0.0
        %780 = vmatpush1.msra.mxu0 %v627
        %781 = vmatprep.subr.mxu0 0.0
        %782 = vmatpush1.msra.mxu0 %v628
        %783 = vmatprep.subr.mxu0 0.0
        %784 = vmatpush1.msra.mxu0 %v629
        %785 = vmatprep.subr.mxu0 0.0
        %786 = vmatpush1.msra.mxu0 0.0
        %787 = vmatprep.subr.mxu0 0.0
        %788 = vmatpush1.msra.mxu0 0.0
        %789 = vmatprep.subr.mxu0 0.0
        %790 = vmatpush1.msra.mxu0 0.0
        %791 = vmatprep.subr.mxu0 0.0
        %792 = vmatpush1.msra.mxu0 0.0
        %793 = vmatprep.subr.mxu0 0.0
        %794 = vmatpush1.msra.mxu0 0.0
        %795 = vmatprep.subr.mxu0 0.0
        %796 = vmatpush1.msra.mxu0 0.0
        %797 = vmatprep.subr.mxu0 0.0
        %798 = vmatpush1.msra.mxu0 0.0
        %799 = vmatprep.subr.mxu0 0.0
        %800 = vmatpush1.msra.mxu0 0.0
        %801 = vmatprep.subr.mxu0 0.0
        %802 = vmatpush1.msra.mxu0 0.0
        %803 = vmatprep.subr.mxu0 0.0
        %804 = vmatpush1.msra.mxu0 0.0
        %805 = vmatprep.subr.mxu0 0.0
        %806 = vmatpush1.msra.mxu0 0.0
        %807 = vmatprep.subr.mxu0 0.0
        %808 = vmatpush1.msra.mxu0 0.0
        %809 = vmatprep.subr.mxu0 0.0
        %810 = vmatpush1.msra.mxu0 0.0
        %811 = vmatprep.subr.mxu0 0.0
        %812 = vmatpush1.msra.mxu0 0.0
        %813 = vmatprep.subr.mxu0 0.0
        %814 = vmatpush1.msra.mxu0 0.0
        %815 = vmatprep.subr.mxu0 0.0
        %816 = vmatpush1.msra.mxu0 0.0
        %817 = vmatprep.subr.mxu0 0.0
        %818 = vmatpush1.msra.mxu0 0.0
        %819 = vmatprep.subr.mxu0 0.0
        %820 = vmatpush1.msra.mxu0 0.0
        %821 = vmatprep.subr.mxu0 0.0
        %822 = vmatpush1.msra.mxu0 0.0
        %823 = vmatprep.subr.mxu0 0.0
        %824 = vmatpush1.msra.mxu0 0.0
        %825 = vmatprep.subr.mxu0 0.0
        %826 = vmatpush1.msra.mxu0 0.0
        %827 = vmatprep.subr.mxu0 0.0
        %828 = vmatpush1.msra.mxu0 0.0
        %829 = vmatprep.subr.mxu0 0.0
        %830 = vmatpush1.msra.mxu0 0.0
        %831 = vmatprep.subr.mxu0 0.0
        %832 = vmatpush1.msra.mxu0 0.0
        %833 = vmatprep.subr.mxu0 0.0
        %834 = vmatpush1.msra.mxu0 0.0
        %835 = vmatprep.subr.mxu0 0.0
        %836 = vmatpush1.msra.mxu0 0.0
        %837 = vmatprep.subr.mxu0 0.0
        %838 = vmatpush1.msra.mxu0 0.0
        %839 = vmatprep.subr.mxu0 0.0
        %840 = vmatpush1.msra.mxu0 0.0
        %841 = vmatprep.mubr.f32.mxu0 0.0
        %842 = vmatmul.mubr.f32.gmra.mrb[0].mxu0 %v635
        %v843 = vpop.f32.mrb[0].mxu0
        %v844 = vadd.f32 0.0, %v843
        %v845 = vpop.f32.mrb[0].mxu0
        %846 = vdwg.mxu0
        %847 = vmatprep.subr.mxu0 0.0
        %848 = vmatpush1.msra.mxu0 %v630
        %849 = vmatprep.subr.mxu0 0.0
        %850 = vmatpush1.msra.mxu0 %v631
        %851 = vmatprep.subr.mxu0 0.0
        %852 = vmatpush1.msra.mxu0 %v632
        %853 = vmatprep.subr.mxu0 0.0
        %854 = vmatpush1.msra.mxu0 %v633
        %855 = vmatprep.subr.mxu0 0.0
        %856 = vmatpush1.msra.mxu0 0.0
        %857 = vmatprep.subr.mxu0 0.0
        %858 = vmatpush1.msra.mxu0 0.0
        %859 = vmatprep.subr.mxu0 0.0
        %860 = vmatpush1.msra.mxu0 0.0
        %861 = vmatprep.subr.mxu0 0.0
        %862 = vmatpush1.msra.mxu0 0.0
        %863 = vmatprep.subr.mxu0 0.0
        %864 = vmatpush1.msra.mxu0 0.0
        %865 = vmatprep.subr.mxu0 0.0
        %866 = vmatpush1.msra.mxu0 0.0
        %867 = vmatprep.subr.mxu0 0.0
        %868 = vmatpush1.msra.mxu0 0.0
        %869 = vmatprep.subr.mxu0 0.0
        %870 = vmatpush1.msra.mxu0 0.0
        %871 = vmatprep.subr.mxu0 0.0
        %872 = vmatpush1.msra.mxu0 0.0
        %873 = vmatprep.subr.mxu0 0.0
        %874 = vmatpush1.msra.mxu0 0.0
        %875 = vmatprep.subr.mxu0 0.0
        %876 = vmatpush1.msra.mxu0 0.0
        %877 = vmatprep.subr.mxu0 0.0
        %878 = vmatpush1.msra.mxu0 0.0
        %879 = vmatprep.subr.mxu0 0.0
        %880 = vmatpush1.msra.mxu0 0.0
        %881 = vmatprep.subr.mxu0 0.0
        %882 = vmatpush1.msra.mxu0 0.0
        %883 = vmatprep.subr.mxu0 0.0
        %884 = vmatpush1.msra.mxu0 0.0
        %885 = vmatprep.subr.mxu0 0.0
        %886 = vmatpush1.msra.mxu0 0.0
        %887 = vmatprep.subr.mxu0 0.0
        %888 = vmatpush1.msra.mxu0 0.0
        %889 = vmatprep.subr.mxu0 0.0
        %890 = vmatpush1.msra.mxu0 0.0
        %891 = vmatprep.subr.mxu0 0.0
        %892 = vmatpush1.msra.mxu0 0.0
        %893 = vmatprep.subr.mxu0 0.0
        %894 = vmatpush1.msra.mxu0 0.0
        %895 = vmatprep.subr.mxu0 0.0
        %896 = vmatpush1.msra.mxu0 0.0
        %897 = vmatprep.subr.mxu0 0.0
        %898 = vmatpush1.msra.mxu0 0.0
        %899 = vmatprep.subr.mxu0 0.0
        %900 = vmatpush1.msra.mxu0 0.0
        %901 = vmatprep.subr.mxu0 0.0
        %902 = vmatpush1.msra.mxu0 0.0
        %903 = vmatprep.subr.mxu0 0.0
        %904 = vmatpush1.msra.mxu0 0.0
        %905 = vmatprep.subr.mxu0 0.0
        %906 = vmatpush1.msra.mxu0 0.0
        %907 = vmatprep.subr.mxu0 0.0
        %908 = vmatpush1.msra.mxu0 0.0
        %909 = vmatprep.subr.mxu0 0.0
        %910 = vmatpush1.msra.mxu0 0.0
        %911 = vmatprep.mubr.f32.mxu0 0.0
        %912 = vmatmul.mubr.f32.gmra.mrb[0].mxu0 %v635
        %v913 = vpop.f32.mrb[0].mxu0
        %v914 = vadd.f32 0.0, %v913
        %v915 = vpop.f32.mrb[0].mxu0
        %916 = vdwg.mxu0
        %v917 = vld [vmem:[%s4] sm:$0xff]
        %v918 = vld [vmem:[%s4 + $0x8] sm:$0xff]
        %v919 = vld [vmem:[%s4 + $0x10] sm:$0xff]
        %v920 = vld [vmem:[%s4 + $0x18] sm:$0xff]
        %v921 = vld [vmem:[%s4 + $0x20] sm:$0xff]
        %v922 = vld [vmem:[%s4 + $0x28] sm:$0xff]
        %v923 = vld [vmem:[%s4 + $0x30] sm:$0xff]
        %v924 = vld [vmem:[%s4 + $0x38] sm:$0xff]
        %v925 = vld [vmem:[%s4 + $0x40] sm:$0xff]
        %v926 = vld [vmem:[%s4 + $0x48] sm:$0xff]
        %v927 = vld [vmem:[%s4 + $0x50] sm:$0xff]
        %v928 = vld [vmem:[%s4 + $0x58] sm:$0xff]
        %v929 = vld [vmem:[%s4 + $0x60] sm:$0xff]
        %v930 = vld [vmem:[%s4 + $0x68] sm:$0xff]
        %v931 = vld [vmem:[%s4 + $0x70] sm:$0xff]
        %v932 = vld [vmem:[%s4 + $0x78] sm:$0xff]
        %933 = vmatprep.subr.mxu0 0.0
        %934 = vmatpush1.msra.mxu0 %v917
        %935 = vmatprep.subr.mxu0 0.0
        %936 = vmatpush1.msra.mxu0 %v918
        %937 = vmatprep.subr.mxu0 0.0
        %938 = vmatpush1.msra.mxu0 %v919
        %939 = vmatprep.subr.mxu0 0.0
        %940 = vmatpush1.msra.mxu0 %v920
        %941 = vmatprep.subr.mxu0 0.0
        %942 = vmatpush1.msra.mxu0 0.0
        %943 = vmatprep.subr.mxu0 0.0
        %944 = vmatpush1.msra.mxu0 0.0
        %945 = vmatprep.subr.mxu0 0.0
        %946 = vmatpush1.msra.mxu0 0.0
        %947 = vmatprep.subr.mxu0 0.0
        %948 = vmatpush1.msra.mxu0 0.0
        %949 = vmatprep.subr.mxu0 0.0
        %950 = vmatpush1.msra.mxu0 0.0
        %951 = vmatprep.subr.mxu0 0.0
        %952 = vmatpush1.msra.mxu0 0.0
        %953 = vmatprep.subr.mxu0 0.0
        %954 = vmatpush1.msra.mxu0 0.0
        %955 = vmatprep.subr.mxu0 0.0
        %956 = vmatpush1.msra.mxu0 0.0
        %957 = vmatprep.subr.mxu0 0.0
        %958 = vmatpush1.msra.mxu0 0.0
        %959 = vmatprep.subr.mxu0 0.0
        %960 = vmatpush1.msra.mxu0 0.0
        %961 = vmatprep.subr.mxu0 0.0
        %962 = vmatpush1.msra.mxu0 0.0
        %963 = vmatprep.subr.mxu0 0.0
        %964 = vmatpush1.msra.mxu0 0.0
        %965 = vmatprep.subr.mxu0 0.0
        %966 = vmatpush1.msra.mxu0 0.0
        %967 = vmatprep.subr.mxu0 0.0
        %968 = vmatpush1.msra.mxu0 0.0
        %969 = vmatprep.subr.mxu0 0.0
        %970 = vmatpush1.msra.mxu0 0.0
        %971 = vmatprep.subr.mxu0 0.0
        %972 = vmatpush1.msra.mxu0 0.0
        %973 = vmatprep.subr.mxu0 0.0
        %974 = vmatpush1.msra.mxu0 0.0
        %975 = vmatprep.subr.mxu0 0.0
        %976 = vmatpush1.msra.mxu0 0.0
        %977 = vmatprep.subr.mxu0 0.0
        %978 = vmatpush1.msra.mxu0 0.0
        %979 = vmatprep.subr.mxu0 0.0
        %980 = vmatpush1.msra.mxu0 0.0
        %981 = vmatprep.subr.mxu0 0.0
        %982 = vmatpush1.msra.mxu0 0.0
        %983 = vmatprep.subr.mxu0 0.0
        %984 = vmatpush1.msra.mxu0 0.0
        %985 = vmatprep.subr.mxu0 0.0
        %986 = vmatpush1.msra.mxu0 0.0
        %987 = vmatprep.subr.mxu0 0.0
        %988 = vmatpush1.msra.mxu0 0.0
        %989 = vmatprep.subr.mxu0 0.0
        %990 = vmatpush1.msra.mxu0 0.0
        %991 = vmatprep.subr.mxu0 0.0
        %992 = vmatpush1.msra.mxu0 0.0
        %993 = vmatprep.subr.mxu0 0.0
        %994 = vmatpush1.msra.mxu0 0.0
        %995 = vmatprep.subr.mxu0 0.0
        %996 = vmatpush1.msra.mxu0 0.0
        %997 = vmatprep.mubr.f32.mxu0 0.0
        %998 = vmatmul.mubr.f32.gmra.mrb[0].mxu0 %v635
        %v999 = vpop.f32.mrb[0].mxu0
        %v1000 = vadd.f32 0.0, %v999
        %v1001 = vpop.f32.mrb[0].mxu0
        %1002 = vdwg.mxu0
        %1003 = vmatprep.subr.mxu0 0.0
        %1004 = vmatpush1.msra.mxu0 %v921
        %1005 = vmatprep.subr.mxu0 0.0
        %1006 = vmatpush1.msra.mxu0 %v922
        %1007 = vmatprep.subr.mxu0 0.0
        %1008 = vmatpush1.msra.mxu0 %v923
        %1009 = vmatprep.subr.mxu0 0.0
        %1010 = vmatpush1.msra.mxu0 %v924
        %1011 = vmatprep.subr.mxu0 0.0
        %1012 = vmatpush1.msra.mxu0 0.0
        %1013 = vmatprep.subr.mxu0 0.0
        %1014 = vmatpush1.msra.mxu0 0.0
        %1015 = vmatprep.subr.mxu0 0.0
        %1016 = vmatpush1.msra.mxu0 0.0
        %1017 = vmatprep.subr.mxu0 0.0
        %1018 = vmatpush1.msra.mxu0 0.0
        %1019 = vmatprep.subr.mxu0 0.0
        %1020 = vmatpush1.msra.mxu0 0.0
        %1021 = vmatprep.subr.mxu0 0.0
        %1022 = vmatpush1.msra.mxu0 0.0
        %1023 = vmatprep.subr.mxu0 0.0
        %1024 = vmatpush1.msra.mxu0 0.0
        %1025 = vmatprep.subr.mxu0 0.0
        %1026 = vmatpush1.msra.mxu0 0.0
        %1027 = vmatprep.subr.mxu0 0.0
        %1028 = vmatpush1.msra.mxu0 0.0
        %1029 = vmatprep.subr.mxu0 0.0
        %1030 = vmatpush1.msra.mxu0 0.0
        %1031 = vmatprep.subr.mxu0 0.0
        %1032 = vmatpush1.msra.mxu0 0.0
        %1033 = vmatprep.subr.mxu0 0.0
        %1034 = vmatpush1.msra.mxu0 0.0
        %1035 = vmatprep.subr.mxu0 0.0
        %1036 = vmatpush1.msra.mxu0 0.0
        %1037 = vmatprep.subr.mxu0 0.0
        %1038 = vmatpush1.msra.mxu0 0.0
        %1039 = vmatprep.subr.mxu0 0.0
        %1040 = vmatpush1.msra.mxu0 0.0
        %1041 = vmatprep.subr.mxu0 0.0
        %1042 = vmatpush1.msra.mxu0 0.0
        %1043 = vmatprep.subr.mxu0 0.0
        %1044 = vmatpush1.msra.mxu0 0.0
        %1045 = vmatprep.subr.mxu0 0.0
        %1046 = vmatpush1.msra.mxu0 0.0
        %1047 = vmatprep.subr.mxu0 0.0
        %1048 = vmatpush1.msra.mxu0 0.0
        %1049 = vmatprep.subr.mxu0 0.0
        %1050 = vmatpush1.msra.mxu0 0.0
        %1051 = vmatprep.subr.mxu0 0.0
        %1052 = vmatpush1.msra.mxu0 0.0
        %1053 = vmatprep.subr.mxu0 0.0
        %1054 = vmatpush1.msra.mxu0 0.0
        %1055 = vmatprep.subr.mxu0 0.0
        %1056 = vmatpush1.msra.mxu0 0.0
        %1057 = vmatprep.subr.mxu0 0.0
        %1058 = vmatpush1.msra.mxu0 0.0
        %1059 = vmatprep.subr.mxu0 0.0
        %1060 = vmatpush1.msra.mxu0 0.0
        %1061 = vmatprep.subr.mxu0 0.0
        %1062 = vmatpush1.msra.mxu0 0.0
        %1063 = vmatprep.subr.mxu0 0.0
        %1064 = vmatpush1.msra.mxu0 0.0
        %1065 = vmatprep.subr.mxu0 0.0
        %1066 = vmatpush1.msra.mxu0 0.0
        %1067 = vmatprep.mubr.f32.mxu0 0.0
        %1068 = vmatmul.mubr.f32.gmra.mrb[0].mxu0 %v635
        %v1069 = vpop.f32.mrb[0].mxu0
        %v1070 = vadd.f32 0.0, %v1069
        %v1071 = vpop.f32.mrb[0].mxu0
        %1072 = vdwg.mxu0
        %1073 = vmatprep.subr.mxu0 0.0
        %1074 = vmatpush1.msra.mxu0 %v925
        %1075 = vmatprep.subr.mxu0 0.0
        %1076 = vmatpush1.msra.mxu0 %v926
        %1077 = vmatprep.subr.mxu0 0.0
        %1078 = vmatpush1.msra.mxu0 %v927
        %1079 = vmatprep.subr.mxu0 0.0
        %1080 = vmatpush1.msra.mxu0 %v928
        %1081 = vmatprep.subr.mxu0 0.0
        %1082 = vmatpush1.msra.mxu0 0.0
        %1083 = vmatprep.subr.mxu0 0.0
        %1084 = vmatpush1.msra.mxu0 0.0
        %1085 = vmatprep.subr.mxu0 0.0
        %1086 = vmatpush1.msra.mxu0 0.0
        %1087 = vmatprep.subr.mxu0 0.0
        %1088 = vmatpush1.msra.mxu0 0.0
        %1089 = vmatprep.subr.mxu0 0.0
        %1090 = vmatpush1.msra.mxu0 0.0
        %1091 = vmatprep.subr.mxu0 0.0
        %1092 = vmatpush1.msra.mxu0 0.0
        %1093 = vmatprep.subr.mxu0 0.0
        %1094 = vmatpush1.msra.mxu0 0.0
        %1095 = vmatprep.subr.mxu0 0.0
        %1096 = vmatpush1.msra.mxu0 0.0
        %1097 = vmatprep.subr.mxu0 0.0
        %1098 = vmatpush1.msra.mxu0 0.0
        %1099 = vmatprep.subr.mxu0 0.0
        %1100 = vmatpush1.msra.mxu0 0.0
        %1101 = vmatprep.subr.mxu0 0.0
        %1102 = vmatpush1.msra.mxu0 0.0
        %1103 = vmatprep.subr.mxu0 0.0
        %1104 = vmatpush1.msra.mxu0 0.0
        %1105 = vmatprep.subr.mxu0 0.0
        %1106 = vmatpush1.msra.mxu0 0.0
        %1107 = vmatprep.subr.mxu0 0.0
        %1108 = vmatpush1.msra.mxu0 0.0
        %1109 = vmatprep.subr.mxu0 0.0
        %1110 = vmatpush1.msra.mxu0 0.0
        %1111 = vmatprep.subr.mxu0 0.0
        %1112 = vmatpush1.msra.mxu0 0.0
        %1113 = vmatprep.subr.mxu0 0.0
        %1114 = vmatpush1.msra.mxu0 0.0
        %1115 = vmatprep.subr.mxu0 0.0
        %1116 = vmatpush1.msra.mxu0 0.0
        %1117 = vmatprep.subr.mxu0 0.0
        %1118 = vmatpush1.msra.mxu0 0.0
        %1119 = vmatprep.subr.mxu0 0.0
        %1120 = vmatpush1.msra.mxu0 0.0
        %1121 = vmatprep.subr.mxu0 0.0
        %1122 = vmatpush1.msra.mxu0 0.0
        %1123 = vmatprep.subr.mxu0 0.0
        %1124 = vmatpush1.msra.mxu0 0.0
        %1125 = vmatprep.subr.mxu0 0.0
        %1126 = vmatpush1.msra.mxu0 0.0
        %1127 = vmatprep.subr.mxu0 0.0
        %1128 = vmatpush1.msra.mxu0 0.0
        %1129 = vmatprep.subr.mxu0 0.0
        %1130 = vmatpush1.msra.mxu0 0.0
        %1131 = vmatprep.subr.mxu0 0.0
        %1132 = vmatpush1.msra.mxu0 0.0
        %1133 = vmatprep.subr.mxu0 0.0
        %1134 = vmatpush1.msra.mxu0 0.0
        %1135 = vmatprep.subr.mxu0 0.0
        %1136 = vmatpush1.msra.mxu0 0.0
        %1137 = vmatprep.mubr.f32.mxu0 0.0
        %1138 = vmatmul.mubr.f32.gmra.mrb[0].mxu0 %v635
        %v1139 = vpop.f32.mrb[0].mxu0
        %v1140 = vadd.f32 0.0, %v1139
        %v1141 = vpop.f32.mrb[0].mxu0
        %1142 = vdwg.mxu0
        %1143 = vmatprep.subr.mxu0 0.0
        %1144 = vmatpush1.msra.mxu0 %v929
        %1145 = vmatprep.subr.mxu0 0.0
        %1146 = vmatpush1.msra.mxu0 %v930
        %1147 = vmatprep.subr.mxu0 0.0
        %1148 = vmatpush1.msra.mxu0 %v931
        %1149 = vmatprep.subr.mxu0 0.0
        %1150 = vmatpush1.msra.mxu0 %v932
        %1151 = vmatprep.subr.mxu0 0.0
        %1152 = vmatpush1.msra.mxu0 0.0
        %1153 = vmatprep.subr.mxu0 0.0
        %1154 = vmatpush1.msra.mxu0 0.0
        %1155 = vmatprep.subr.mxu0 0.0
        %1156 = vmatpush1.msra.mxu0 0.0
        %1157 = vmatprep.subr.mxu0 0.0
        %1158 = vmatpush1.msra.mxu0 0.0
        %1159 = vmatprep.subr.mxu0 0.0
        %1160 = vmatpush1.msra.mxu0 0.0
        %1161 = vmatprep.subr.mxu0 0.0
        %1162 = vmatpush1.msra.mxu0 0.0
        %1163 = vmatprep.subr.mxu0 0.0
        %1164 = vmatpush1.msra.mxu0 0.0
        %1165 = vmatprep.subr.mxu0 0.0
        %1166 = vmatpush1.msra.mxu0 0.0
        %1167 = vmatprep.subr.mxu0 0.0
        %1168 = vmatpush1.msra.mxu0 0.0
        %1169 = vmatprep.subr.mxu0 0.0
        %1170 = vmatpush1.msra.mxu0 0.0
        %1171 = vmatprep.subr.mxu0 0.0
        %1172 = vmatpush1.msra.mxu0 0.0
        %1173 = vmatprep.subr.mxu0 0.0
        %1174 = vmatpush1.msra.mxu0 0.0
        %1175 = vmatprep.subr.mxu0 0.0
        %1176 = vmatpush1.msra.mxu0 0.0
        %1177 = vmatprep.subr.mxu0 0.0
        %1178 = vmatpush1.msra.mxu0 0.0
        %1179 = vmatprep.subr.mxu0 0.0
        %1180 = vmatpush1.msra.mxu0 0.0
        %1181 = vmatprep.subr.mxu0 0.0
        %1182 = vmatpush1.msra.mxu0 0.0
        %1183 = vmatprep.subr.mxu0 0.0
        %1184 = vmatpush1.msra.mxu0 0.0
        %1185 = vmatprep.subr.mxu0 0.0
        %1186 = vmatpush1.msra.mxu0 0.0
        %1187 = vmatprep.subr.mxu0 0.0
        %1188 = vmatpush1.msra.mxu0 0.0
        %1189 = vmatprep.subr.mxu0 0.0
        %1190 = vmatpush1.msra.mxu0 0.0
        %1191 = vmatprep.subr.mxu0 0.0
        %1192 = vmatpush1.msra.mxu0 0.0
        %1193 = vmatprep.subr.mxu0 0.0
        %1194 = vmatpush1.msra.mxu0 0.0
        %1195 = vmatprep.subr.mxu0 0.0
        %1196 = vmatpush1.msra.mxu0 0.0
        %1197 = vmatprep.subr.mxu0 0.0
        %1198 = vmatpush1.msra.mxu0 0.0
        %1199 = vmatprep.subr.mxu0 0.0
        %1200 = vmatpush1.msra.mxu0 0.0
        %1201 = vmatprep.subr.mxu0 0.0
        %1202 = vmatpush1.msra.mxu0 0.0
        %1203 = vmatprep.subr.mxu0 0.0
        %1204 = vmatpush1.msra.mxu0 0.0
        %1205 = vmatprep.subr.mxu0 0.0
        %1206 = vmatpush1.msra.mxu0 0.0
        %1207 = vmatprep.mubr.f32.mxu0 0.0
        %1208 = vmatmul.mubr.f32.gmra.mrb[0].mxu0 %v635
        %v1209 = vpop.f32.mrb[0].mxu0
        %v1210 = vadd.f32 0.0, %v1209
        %v1211 = vpop.f32.mrb[0].mxu0
        %1212 = vdwg.mxu0
        %vm1213 = vcmask 130048
        %v1215 = vsel %vm1213, %v405, 0
        %v1218 = vsel %vm1213, %v704, 0
        %1220 = vmatprep.subr.mxu0 0.0
        %1221 = vmatpush1.xpose.msra.mxu0 %v1218
        %1222 = vmatprep.subr.mxu0 0.0
        %1223 = vmatpush1.xpose.msra.mxu0 0.0
        %1224 = vmatprep.subr.mxu0 0.0
        %1225 = vmatpush1.xpose.msra.mxu0 0.0
        %1226 = vmatprep.subr.mxu0 0.0
        %1227 = vmatpush1.xpose.msra.mxu0 0.0
        %1228 = vmatprep.subr.mxu0 0.0
        %1229 = vmatpush1.xpose.msra.mxu0 0.0
        %1230 = vmatprep.subr.mxu0 0.0
        %1231 = vmatpush1.xpose.msra.mxu0 0.0
        %1232 = vmatprep.subr.mxu0 0.0
        %1233 = vmatpush1.xpose.msra.mxu0 0.0
        %1234 = vmatprep.subr.mxu0 0.0
        %1235 = vmatpush1.xpose.msra.mxu0 0.0
        %1236 = vmatprep.subr.mxu0 0.0
        %1237 = vmatpush1.xpose.msra.mxu0 0.0
        %1238 = vmatprep.subr.mxu0 0.0
        %1239 = vmatpush1.xpose.msra.mxu0 0.0
        %1240 = vmatprep.subr.mxu0 0.0
        %1241 = vmatpush1.xpose.msra.mxu0 0.0
        %1242 = vmatprep.subr.mxu0 0.0
        %1243 = vmatpush1.xpose.msra.mxu0 0.0
        %1244 = vmatprep.subr.mxu0 0.0
        %1245 = vmatpush1.xpose.msra.mxu0 0.0
        %1246 = vmatprep.subr.mxu0 0.0
        %1247 = vmatpush1.xpose.msra.mxu0 0.0
        %1248 = vmatprep.subr.mxu0 0.0
        %1249 = vmatpush1.xpose.msra.mxu0 0.0
        %1250 = vmatprep.subr.mxu0 0.0
        %1251 = vmatpush1.xpose.msra.mxu0 0.0
        %1252 = vmatprep.subr.mxu0 0.0
        %1253 = vmatpush1.xpose.msra.mxu0 0.0
        %1254 = vmatprep.subr.mxu0 0.0
        %1255 = vmatpush1.xpose.msra.mxu0 0.0
        %1256 = vmatprep.subr.mxu0 0.0
        %1257 = vmatpush1.xpose.msra.mxu0 0.0
        %1258 = vmatprep.subr.mxu0 0.0
        %1259 = vmatpush1.xpose.msra.mxu0 0.0
        %1260 = vmatprep.subr.mxu0 0.0
        %1261 = vmatpush1.xpose.msra.mxu0 0.0
        %1262 = vmatprep.subr.mxu0 0.0
        %1263 = vmatpush1.xpose.msra.mxu0 0.0
        %1264 = vmatprep.subr.mxu0 0.0
        %1265 = vmatpush1.xpose.msra.mxu0 0.0
        %1266 = vmatprep.subr.mxu0 0.0
        %1267 = vmatpush1.xpose.msra.mxu0 0.0
        %1268 = vmatprep.subr.mxu0 0.0
        %1269 = vmatpush1.xpose.msra.mxu0 0.0
        %1270 = vmatprep.subr.mxu0 0.0
        %1271 = vmatpush1.xpose.msra.mxu0 0.0
        %1272 = vmatprep.subr.mxu0 0.0
        %1273 = vmatpush1.xpose.msra.mxu0 0.0
        %1274 = vmatprep.subr.mxu0 0.0
        %1275 = vmatpush1.xpose.msra.mxu0 0.0
        %1276 = vmatprep.subr.mxu0 0.0
        %1277 = vmatpush1.xpose.msra.mxu0 0.0
        %1278 = vmatprep.subr.mxu0 0.0
        %1279 = vmatpush1.xpose.msra.mxu0 0.0
        %1280 = vmatprep.subr.mxu0 0.0
        %1281 = vmatpush1.xpose.msra.mxu0 0.0
        %1282 = vmatprep.subr.mxu0 0.0
        %1283 = vmatpush1.xpose.msra.mxu0 0.0
        %1284 = vmatprep.mubr.f32.mxu0 0.0
        %1285 = vmatmul.mubr.f32.gmra.mrb[0].mxu0 %v1215
        %v1286 = vpop.f32.mrb[0].mxu0
        %v1287 = vadd.f32 0.0, %v1286
        %v1288 = vpop.f32.mrb[0].mxu0
        %1289 = vdwg.mxu0
        %v1291 = vsel %vm1213, %v475, 0
        %v1294 = vsel %vm1213, %v774, 0
        %1296 = vmatprep.subr.mxu0 0.0
        %1297 = vmatpush1.xpose.msra.mxu0 %v1294
        %1298 = vmatprep.subr.mxu0 0.0
        %1299 = vmatpush1.xpose.msra.mxu0 0.0
        %1300 = vmatprep.subr.mxu0 0.0
        %1301 = vmatpush1.xpose.msra.mxu0 0.0
        %1302 = vmatprep.subr.mxu0 0.0
        %1303 = vmatpush1.xpose.msra.mxu0 0.0
        %1304 = vmatprep.subr.mxu0 0.0
        %1305 = vmatpush1.xpose.msra.mxu0 0.0
        %1306 = vmatprep.subr.mxu0 0.0
        %1307 = vmatpush1.xpose.msra.mxu0 0.0
        %1308 = vmatprep.subr.mxu0 0.0
        %1309 = vmatpush1.xpose.msra.mxu0 0.0
        %1310 = vmatprep.subr.mxu0 0.0
        %1311 = vmatpush1.xpose.msra.mxu0 0.0
        %1312 = vmatprep.subr.mxu0 0.0
        %1313 = vmatpush1.xpose.msra.mxu0 0.0
        %1314 = vmatprep.subr.mxu0 0.0
        %1315 = vmatpush1.xpose.msra.mxu0 0.0
        %1316 = vmatprep.subr.mxu0 0.0
        %1317 = vmatpush1.xpose.msra.mxu0 0.0
        %1318 = vmatprep.subr.mxu0 0.0
        %1319 = vmatpush1.xpose.msra.mxu0 0.0
        %1320 = vmatprep.subr.mxu0 0.0
        %1321 = vmatpush1.xpose.msra.mxu0 0.0
        %1322 = vmatprep.subr.mxu0 0.0
        %1323 = vmatpush1.xpose.msra.mxu0 0.0
        %1324 = vmatprep.subr.mxu0 0.0
        %1325 = vmatpush1.xpose.msra.mxu0 0.0
        %1326 = vmatprep.subr.mxu0 0.0
        %1327 = vmatpush1.xpose.msra.mxu0 0.0
        %1328 = vmatprep.subr.mxu0 0.0
        %1329 = vmatpush1.xpose.msra.mxu0 0.0
        %1330 = vmatprep.subr.mxu0 0.0
        %1331 = vmatpush1.xpose.msra.mxu0 0.0
        %1332 = vmatprep.subr.mxu0 0.0
        %1333 = vmatpush1.xpose.msra.mxu0 0.0
        %1334 = vmatprep.subr.mxu0 0.0
        %1335 = vmatpush1.xpose.msra.mxu0 0.0
        %1336 = vmatprep.subr.mxu0 0.0
        %1337 = vmatpush1.xpose.msra.mxu0 0.0
        %1338 = vmatprep.subr.mxu0 0.0
        %1339 = vmatpush1.xpose.msra.mxu0 0.0
        %1340 = vmatprep.subr.mxu0 0.0
        %1341 = vmatpush1.xpose.msra.mxu0 0.0
        %1342 = vmatprep.subr.mxu0 0.0
        %1343 = vmatpush1.xpose.msra.mxu0 0.0
        %1344 = vmatprep.subr.mxu0 0.0
        %1345 = vmatpush1.xpose.msra.mxu0 0.0
        %1346 = vmatprep.subr.mxu0 0.0
        %1347 = vmatpush1.xpose.msra.mxu0 0.0
        %1348 = vmatprep.subr.mxu0 0.0
        %1349 = vmatpush1.xpose.msra.mxu0 0.0
        %1350 = vmatprep.subr.mxu0 0.0
        %1351 = vmatpush1.xpose.msra.mxu0 0.0
        %1352 = vmatprep.subr.mxu0 0.0
        %1353 = vmatpush1.xpose.msra.mxu0 0.0
        %1354 = vmatprep.subr.mxu0 0.0
        %1355 = vmatpush1.xpose.msra.mxu0 0.0
        %1356 = vmatprep.subr.mxu0 0.0
        %1357 = vmatpush1.xpose.msra.mxu0 0.0
        %1358 = vmatprep.subr.mxu0 0.0
        %1359 = vmatpush1.xpose.msra.mxu0 0.0
        %1360 = vmatprep.mubr.f32.mxu0 0.0
        %1361 = vmatmul.mubr.f32.gmra.mrb[0].mxu0 %v1291
        %v1362 = vpop.f32.mrb[0].mxu0
        %v1363 = vadd.f32 0.0, %v1362
        %v1364 = vpop.f32.mrb[0].mxu0
        %1365 = vdwg.mxu0
        %v1367 = vsel %vm1213, %v545, 0
        %v1370 = vsel %vm1213, %v844, 0
        %1372 = vmatprep.subr.mxu0 0.0
        %1373 = vmatpush1.xpose.msra.mxu0 %v1370
        %1374 = vmatprep.subr.mxu0 0.0
        %1375 = vmatpush1.xpose.msra.mxu0 0.0
        %1376 = vmatprep.subr.mxu0 0.0
        %1377 = vmatpush1.xpose.msra.mxu0 0.0
        %1378 = vmatprep.subr.mxu0 0.0
        %1379 = vmatpush1.xpose.msra.mxu0 0.0
        %1380 = vmatprep.subr.mxu0 0.0
        %1381 = vmatpush1.xpose.msra.mxu0 0.0
        %1382 = vmatprep.subr.mxu0 0.0
        %1383 = vmatpush1.xpose.msra.mxu0 0.0
        %1384 = vmatprep.subr.mxu0 0.0
        %1385 = vmatpush1.xpose.msra.mxu0 0.0
        %1386 = vmatprep.subr.mxu0 0.0
        %1387 = vmatpush1.xpose.msra.mxu0 0.0
        %1388 = vmatprep.subr.mxu0 0.0
        %1389 = vmatpush1.xpose.msra.mxu0 0.0
        %1390 = vmatprep.subr.mxu0 0.0
        %1391 = vmatpush1.xpose.msra.mxu0 0.0
        %1392 = vmatprep.subr.mxu0 0.0
        %1393 = vmatpush1.xpose.msra.mxu0 0.0
        %1394 = vmatprep.subr.mxu0 0.0
        %1395 = vmatpush1.xpose.msra.mxu0 0.0
        %1396 = vmatprep.subr.mxu0 0.0
        %1397 = vmatpush1.xpose.msra.mxu0 0.0
        %1398 = vmatprep.subr.mxu0 0.0
        %1399 = vmatpush1.xpose.msra.mxu0 0.0
        %1400 = vmatprep.subr.mxu0 0.0
        %1401 = vmatpush1.xpose.msra.mxu0 0.0
        %1402 = vmatprep.subr.mxu0 0.0
        %1403 = vmatpush1.xpose.msra.mxu0 0.0
        %1404 = vmatprep.subr.mxu0 0.0
        %1405 = vmatpush1.xpose.msra.mxu0 0.0
        %1406 = vmatprep.subr.mxu0 0.0
        %1407 = vmatpush1.xpose.msra.mxu0 0.0
        %1408 = vmatprep.subr.mxu0 0.0
        %1409 = vmatpush1.xpose.msra.mxu0 0.0
        %1410 = vmatprep.subr.mxu0 0.0
        %1411 = vmatpush1.xpose.msra.mxu0 0.0
        %1412 = vmatprep.subr.mxu0 0.0
        %1413 = vmatpush1.xpose.msra.mxu0 0.0
        %1414 = vmatprep.subr.mxu0 0.0
        %1415 = vmatpush1.xpose.msra.mxu0 0.0
        %1416 = vmatprep.subr.mxu0 0.0
        %1417 = vmatpush1.xpose.msra.mxu0 0.0
        %1418 = vmatprep.subr.mxu0 0.0
        %1419 = vmatpush1.xpose.msra.mxu0 0.0
        %1420 = vmatprep.subr.mxu0 0.0
        %1421 = vmatpush1.xpose.msra.mxu0 0.0
        %1422 = vmatprep.subr.mxu0 0.0
        %1423 = vmatpush1.xpose.msra.mxu0 0.0
        %1424 = vmatprep.subr.mxu0 0.0
        %1425 = vmatpush1.xpose.msra.mxu0 0.0
        %1426 = vmatprep.subr.mxu0 0.0
        %1427 = vmatpush1.xpose.msra.mxu0 0.0
        %1428 = vmatprep.subr.mxu0 0.0
        %1429 = vmatpush1.xpose.msra.mxu0 0.0
        %1430 = vmatprep.subr.mxu0 0.0
        %1431 = vmatpush1.xpose.msra.mxu0 0.0
        %1432 = vmatprep.subr.mxu0 0.0
        %1433 = vmatpush1.xpose.msra.mxu0 0.0
        %1434 = vmatprep.subr.mxu0 0.0
        %1435 = vmatpush1.xpose.msra.mxu0 0.0
        %1436 = vmatprep.mubr.f32.mxu0 0.0
        %1437 = vmatmul.mubr.f32.gmra.mrb[0].mxu0 %v1367
        %v1438 = vpop.f32.mrb[0].mxu0
        %v1439 = vadd.f32 0.0, %v1438
        %v1440 = vpop.f32.mrb[0].mxu0
        %1441 = vdwg.mxu0
        %v1443 = vsel %vm1213, %v615, 0
        %v1446 = vsel %vm1213, %v914, 0
        %1448 = vmatprep.subr.mxu0 0.0
        %1449 = vmatpush1.xpose.msra.mxu0 %v1446
        %1450 = vmatprep.subr.mxu0 0.0
        %1451 = vmatpush1.xpose.msra.mxu0 0.0
        %1452 = vmatprep.subr.mxu0 0.0
        %1453 = vmatpush1.xpose.msra.mxu0 0.0
        %1454 = vmatprep.subr.mxu0 0.0
        %1455 = vmatpush1.xpose.msra.mxu0 0.0
        %1456 = vmatprep.subr.mxu0 0.0
        %1457 = vmatpush1.xpose.msra.mxu0 0.0
        %1458 = vmatprep.subr.mxu0 0.0
        %1459 = vmatpush1.xpose.msra.mxu0 0.0
        %1460 = vmatprep.subr.mxu0 0.0
        %1461 = vmatpush1.xpose.msra.mxu0 0.0
        %1462 = vmatprep.subr.mxu0 0.0
        %1463 = vmatpush1.xpose.msra.mxu0 0.0
        %1464 = vmatprep.subr.mxu0 0.0
        %1465 = vmatpush1.xpose.msra.mxu0 0.0
        %1466 = vmatprep.subr.mxu0 0.0
        %1467 = vmatpush1.xpose.msra.mxu0 0.0
        %1468 = vmatprep.subr.mxu0 0.0
        %1469 = vmatpush1.xpose.msra.mxu0 0.0
        %1470 = vmatprep.subr.mxu0 0.0
        %1471 = vmatpush1.xpose.msra.mxu0 0.0
        %1472 = vmatprep.subr.mxu0 0.0
        %1473 = vmatpush1.xpose.msra.mxu0 0.0
        %1474 = vmatprep.subr.mxu0 0.0
        %1475 = vmatpush1.xpose.msra.mxu0 0.0
        %1476 = vmatprep.subr.mxu0 0.0
        %1477 = vmatpush1.xpose.msra.mxu0 0.0
        %1478 = vmatprep.subr.mxu0 0.0
        %1479 = vmatpush1.xpose.msra.mxu0 0.0
        %1480 = vmatprep.subr.mxu0 0.0
        %1481 = vmatpush1.xpose.msra.mxu0 0.0
        %1482 = vmatprep.subr.mxu0 0.0
        %1483 = vmatpush1.xpose.msra.mxu0 0.0
        %1484 = vmatprep.subr.mxu0 0.0
        %1485 = vmatpush1.xpose.msra.mxu0 0.0
        %1486 = vmatprep.subr.mxu0 0.0
        %1487 = vmatpush1.xpose.msra.mxu0 0.0
        %1488 = vmatprep.subr.mxu0 0.0
        %1489 = vmatpush1.xpose.msra.mxu0 0.0
        %1490 = vmatprep.subr.mxu0 0.0
        %1491 = vmatpush1.xpose.msra.mxu0 0.0
        %1492 = vmatprep.subr.mxu0 0.0
        %1493 = vmatpush1.xpose.msra.mxu0 0.0
        %1494 = vmatprep.subr.mxu0 0.0
        %1495 = vmatpush1.xpose.msra.mxu0 0.0
        %1496 = vmatprep.subr.mxu0 0.0
        %1497 = vmatpush1.xpose.msra.mxu0 0.0
        %1498 = vmatprep.subr.mxu0 0.0
        %1499 = vmatpush1.xpose.msra.mxu0 0.0
        %1500 = vmatprep.subr.mxu0 0.0
        %1501 = vmatpush1.xpose.msra.mxu0 0.0
        %1502 = vmatprep.subr.mxu0 0.0
        %1503 = vmatpush1.xpose.msra.mxu0 0.0
        %1504 = vmatprep.subr.mxu0 0.0
        %1505 = vmatpush1.xpose.msra.mxu0 0.0
        %1506 = vmatprep.subr.mxu0 0.0
        %1507 = vmatpush1.xpose.msra.mxu0 0.0
        %1508 = vmatprep.subr.mxu0 0.0
        %1509 = vmatpush1.xpose.msra.mxu0 0.0
        %1510 = vmatprep.subr.mxu0 0.0
        %1511 = vmatpush1.xpose.msra.mxu0 0.0
        %1512 = vmatprep.mubr.f32.mxu0 0.0
        %1513 = vmatmul.mubr.f32.gmra.mrb[0].mxu0 %v1443
        %v1514 = vpop.f32.mrb[0].mxu0
        %v1515 = vadd.f32 0.0, %v1514
        %v1516 = vpop.f32.mrb[0].mxu0
        %1517 = vdwg.mxu0
        %vm1518 = vcmask 64512
        %v1519 = vsel %vm1518, %v1287, -inf
        %1520 = vmax.xlane.f32.xlu0 %v1519
        %v1521 = vpop.xlane.xlu0 %1520
        %v1522 = vsel %vm1518, %v1363, -inf
        %1523 = vmax.xlane.f32.xlu0 %v1522
        %v1524 = vpop.xlane.xlu0 %1523
        %v1525 = vsel %vm1518, %v1439, -inf
        %1526 = vmax.xlane.f32.xlu0 %v1525
        %v1527 = vpop.xlane.xlu0 %1526
        %v1528 = vsel %vm1518, %v1515, -inf
        %1529 = vmax.xlane.f32.xlu0 %v1528
        %v1530 = vpop.xlane.xlu0 %1529
        %v1531 = vsub.f32 %v1287, %v1521
        %v1532 = vsub.f32 %v1363, %v1524
        %v1533 = vsub.f32 %v1439, %v1527
        %v1534 = vsub.f32 %v1515, %v1530
        %v1535 = vmul.f32 %v1531, 1.442695
        %v1536 = vpow.pop %v1535
        %v1537 = vmul.f32 %v1532, 1.442695
        %v1538 = vpow.pop %v1537
        %v1539 = vmul.f32 %v1533, 1.442695
        %v1540 = vpow.pop %v1539
        %v1541 = vmul.f32 %v1534, 1.442695
        %v1542 = vpow.pop %v1541
        %v1543 = vsel %vm1518, %v1536, 0.0
        %1544 = vadd.xlane.f32.xlu0 %v1543
        %v1545 = vpop.xlane.xlu0 %1544
        %v1546 = vsel %vm1518, %v1538, 0.0
        %1547 = vadd.xlane.f32.xlu0 %v1546
        %v1548 = vpop.xlane.xlu0 %1547
        %v1549 = vsel %vm1518, %v1540, 0.0
        %1550 = vadd.xlane.f32.xlu0 %v1549
        %v1551 = vpop.xlane.xlu0 %1550
        %v1552 = vsel %vm1518, %v1542, 0.0
        %1553 = vadd.xlane.f32.xlu0 %v1552
        %v1554 = vpop.xlane.xlu0 %1553
        %v1555 = vrcp.pop %v1545
        %v1556 = vrcp.pop %v1548
        %v1557 = vrcp.pop %v1551
        %v1558 = vrcp.pop %v1554
        %v1559 = vmul.f32 %v1536, %v1555
        %v1560 = vmul.f32 %v1538, %v1556
        %v1561 = vmul.f32 %v1540, %v1557
        %v1562 = vmul.f32 %v1542, %v1558
        %v1564 = vsel %vm1518, %v1559, 0
        %1566 = vmatprep.subr.mxu0 0.0
        %1567 = vmatpush1.msra.mxu0 %v1000
        %1568 = vmatprep.subr.mxu0 0.0
        %1569 = vmatpush1.msra.mxu0 0.0
        %1570 = vmatprep.subr.mxu0 0.0
        %1571 = vmatpush1.msra.mxu0 0.0
        %1572 = vmatprep.subr.mxu0 0.0
        %1573 = vmatpush1.msra.mxu0 0.0
        %1574 = vmatprep.subr.mxu0 0.0
        %1575 = vmatpush1.msra.mxu0 0.0
        %1576 = vmatprep.subr.mxu0 0.0
        %1577 = vmatpush1.msra.mxu0 0.0
        %1578 = vmatprep.subr.mxu0 0.0
        %1579 = vmatpush1.msra.mxu0 0.0
        %1580 = vmatprep.subr.mxu0 0.0
        %1581 = vmatpush1.msra.mxu0 0.0
        %1582 = vmatprep.subr.mxu0 0.0
        %1583 = vmatpush1.msra.mxu0 0.0
        %1584 = vmatprep.subr.mxu0 0.0
        %1585 = vmatpush1.msra.mxu0 0.0
        %1586 = vmatprep.subr.mxu0 0.0
        %1587 = vmatpush1.msra.mxu0 0.0
        %1588 = vmatprep.subr.mxu0 0.0
        %1589 = vmatpush1.msra.mxu0 0.0
        %1590 = vmatprep.subr.mxu0 0.0
        %1591 = vmatpush1.msra.mxu0 0.0
        %1592 = vmatprep.subr.mxu0 0.0
        %1593 = vmatpush1.msra.mxu0 0.0
        %1594 = vmatprep.subr.mxu0 0.0
        %1595 = vmatpush1.msra.mxu0 0.0
        %1596 = vmatprep.subr.mxu0 0.0
        %1597 = vmatpush1.msra.mxu0 0.0
        %1598 = vmatprep.subr.mxu0 0.0
        %1599 = vmatpush1.msra.mxu0 0.0
        %1600 = vmatprep.subr.mxu0 0.0
        %1601 = vmatpush1.msra.mxu0 0.0
        %1602 = vmatprep.subr.mxu0 0.0
        %1603 = vmatpush1.msra.mxu0 0.0
        %1604 = vmatprep.subr.mxu0 0.0
        %1605 = vmatpush1.msra.mxu0 0.0
        %1606 = vmatprep.subr.mxu0 0.0
        %1607 = vmatpush1.msra.mxu0 0.0
        %1608 = vmatprep.subr.mxu0 0.0
        %1609 = vmatpush1.msra.mxu0 0.0
        %1610 = vmatprep.subr.mxu0 0.0
        %1611 = vmatpush1.msra.mxu0 0.0
        %1612 = vmatprep.subr.mxu0 0.0
        %1613 = vmatpush1.msra.mxu0 0.0
        %1614 = vmatprep.subr.mxu0 0.0
        %1615 = vmatpush1.msra.mxu0 0.0
        %1616 = vmatprep.subr.mxu0 0.0
        %1617 = vmatpush1.msra.mxu0 0.0
        %1618 = vmatprep.subr.mxu0 0.0
        %1619 = vmatpush1.msra.mxu0 0.0
        %1620 = vmatprep.subr.mxu0 0.0
        %1621 = vmatpush1.msra.mxu0 0.0
        %1622 = vmatprep.subr.mxu0 0.0
        %1623 = vmatpush1.msra.mxu0 0.0
        %1624 = vmatprep.subr.mxu0 0.0
        %1625 = vmatpush1.msra.mxu0 0.0
        %1626 = vmatprep.subr.mxu0 0.0
        %1627 = vmatpush1.msra.mxu0 0.0
        %1628 = vmatprep.subr.mxu0 0.0
        %1629 = vmatpush1.msra.mxu0 0.0
        %1630 = vmatprep.mubr.f32.mxu0 0.0
        %1631 = vmatmul.mubr.f32.gmra.mrb[0].mxu0 %v1564
        %v1632 = vpop.f32.mrb[0].mxu0
        %v1633 = vadd.f32 0.0, %v1632
        %v1634 = vpop.f32.mrb[0].mxu0
        %1635 = vdwg.mxu0
        %v1637 = vsel %vm1518, %v1560, 0
        %1639 = vmatprep.subr.mxu0 0.0
        %1640 = vmatpush1.msra.mxu0 %v1070
        %1641 = vmatprep.subr.mxu0 0.0
        %1642 = vmatpush1.msra.mxu0 0.0
        %1643 = vmatprep.subr.mxu0 0.0
        %1644 = vmatpush1.msra.mxu0 0.0
        %1645 = vmatprep.subr.mxu0 0.0
        %1646 = vmatpush1.msra.mxu0 0.0
        %1647 = vmatprep.subr.mxu0 0.0
        %1648 = vmatpush1.msra.mxu0 0.0
        %1649 = vmatprep.subr.mxu0 0.0
        %1650 = vmatpush1.msra.mxu0 0.0
        %1651 = vmatprep.subr.mxu0 0.0
        %1652 = vmatpush1.msra.mxu0 0.0
        %1653 = vmatprep.subr.mxu0 0.0
        %1654 = vmatpush1.msra.mxu0 0.0
        %1655 = vmatprep.subr.mxu0 0.0
        %1656 = vmatpush1.msra.mxu0 0.0
        %1657 = vmatprep.subr.mxu0 0.0
        %1658 = vmatpush1.msra.mxu0 0.0
        %1659 = vmatprep.subr.mxu0 0.0
        %1660 = vmatpush1.msra.mxu0 0.0
        %1661 = vmatprep.subr.mxu0 0.0
        %1662 = vmatpush1.msra.mxu0 0.0
        %1663 = vmatprep.subr.mxu0 0.0
        %1664 = vmatpush1.msra.mxu0 0.0
        %1665 = vmatprep.subr.mxu0 0.0
        %1666 = vmatpush1.msra.mxu0 0.0
        %1667 = vmatprep.subr.mxu0 0.0
        %1668 = vmatpush1.msra.mxu0 0.0
        %1669 = vmatprep.subr.mxu0 0.0
        %1670 = vmatpush1.msra.mxu0 0.0
        %1671 = vmatprep.subr.mxu0 0.0
        %1672 = vmatpush1.msra.mxu0 0.0
        %1673 = vmatprep.subr.mxu0 0.0
        %1674 = vmatpush1.msra.mxu0 0.0
        %1675 = vmatprep.subr.mxu0 0.0
        %1676 = vmatpush1.msra.mxu0 0.0
        %1677 = vmatprep.subr.mxu0 0.0
        %1678 = vmatpush1.msra.mxu0 0.0
        %1679 = vmatprep.subr.mxu0 0.0
        %1680 = vmatpush1.msra.mxu0 0.0
        %1681 = vmatprep.subr.mxu0 0.0
        %1682 = vmatpush1.msra.mxu0 0.0
        %1683 = vmatprep.subr.mxu0 0.0
        %1684 = vmatpush1.msra.mxu0 0.0
        %1685 = vmatprep.subr.mxu0 0.0
        %1686 = vmatpush1.msra.mxu0 0.0
        %1687 = vmatprep.subr.mxu0 0.0
        %1688 = vmatpush1.msra.mxu0 0.0
        %1689 = vmatprep.subr.mxu0 0.0
        %1690 = vmatpush1.msra.mxu0 0.0
        %1691 = vmatprep.subr.mxu0 0.0
        %1692 = vmatpush1.msra.mxu0 0.0
        %1693 = vmatprep.subr.mxu0 0.0
        %1694 = vmatpush1.msra.mxu0 0.0
        %1695 = vmatprep.subr.mxu0 0.0
        %1696 = vmatpush1.msra.mxu0 0.0
        %1697 = vmatprep.subr.mxu0 0.0
        %1698 = vmatpush1.msra.mxu0 0.0
        %1699 = vmatprep.subr.mxu0 0.0
        %1700 = vmatpush1.msra.mxu0 0.0
        %1701 = vmatprep.subr.mxu0 0.0
        %1702 = vmatpush1.msra.mxu0 0.0
        %1703 = vmatprep.mubr.f32.mxu0 0.0
        %1704 = vmatmul.mubr.f32.gmra.mrb[0].mxu0 %v1637
        %v1705 = vpop.f32.mrb[0].mxu0
        %v1706 = vadd.f32 0.0, %v1705
        %v1707 = vpop.f32.mrb[0].mxu0
        %1708 = vdwg.mxu0
        %v1710 = vsel %vm1518, %v1561, 0
        %1712 = vmatprep.subr.mxu0 0.0
        %1713 = vmatpush1.msra.mxu0 %v1140
        %1714 = vmatprep.subr.mxu0 0.0
        %1715 = vmatpush1.msra.mxu0 0.0
        %1716 = vmatprep.subr.mxu0 0.0
        %1717 = vmatpush1.msra.mxu0 0.0
        %1718 = vmatprep.subr.mxu0 0.0
        %1719 = vmatpush1.msra.mxu0 0.0
        %1720 = vmatprep.subr.mxu0 0.0
        %1721 = vmatpush1.msra.mxu0 0.0
        %1722 = vmatprep.subr.mxu0 0.0
        %1723 = vmatpush1.msra.mxu0 0.0
        %1724 = vmatprep.subr.mxu0 0.0
        %1725 = vmatpush1.msra.mxu0 0.0
        %1726 = vmatprep.subr.mxu0 0.0
        %1727 = vmatpush1.msra.mxu0 0.0
        %1728 = vmatprep.subr.mxu0 0.0
        %1729 = vmatpush1.msra.mxu0 0.0
        %1730 = vmatprep.subr.mxu0 0.0
        %1731 = vmatpush1.msra.mxu0 0.0
        %1732 = vmatprep.subr.mxu0 0.0
        %1733 = vmatpush1.msra.mxu0 0.0
        %1734 = vmatprep.subr.mxu0 0.0
        %1735 = vmatpush1.msra.mxu0 0.0
        %1736 = vmatprep.subr.mxu0 0.0
        %1737 = vmatpush1.msra.mxu0 0.0
        %1738 = vmatprep.subr.mxu0 0.0
        %1739 = vmatpush1.msra.mxu0 0.0
        %1740 = vmatprep.subr.mxu0 0.0
        %1741 = vmatpush1.msra.mxu0 0.0
        %1742 = vmatprep.subr.mxu0 0.0
        %1743 = vmatpush1.msra.mxu0 0.0
        %1744 = vmatprep.subr.mxu0 0.0
        %1745 = vmatpush1.msra.mxu0 0.0
        %1746 = vmatprep.subr.mxu0 0.0
        %1747 = vmatpush1.msra.mxu0 0.0
        %1748 = vmatprep.subr.mxu0 0.0
        %1749 = vmatpush1.msra.mxu0 0.0
        %1750 = vmatprep.subr.mxu0 0.0
        %1751 = vmatpush1.msra.mxu0 0.0
        %1752 = vmatprep.subr.mxu0 0.0
        %1753 = vmatpush1.msra.mxu0 0.0
        %1754 = vmatprep.subr.mxu0 0.0
        %1755 = vmatpush1.msra.mxu0 0.0
        %1756 = vmatprep.subr.mxu0 0.0
        %1757 = vmatpush1.msra.mxu0 0.0
        %1758 = vmatprep.subr.mxu0 0.0
        %1759 = vmatpush1.msra.mxu0 0.0
        %1760 = vmatprep.subr.mxu0 0.0
        %1761 = vmatpush1.msra.mxu0 0.0
        %1762 = vmatprep.subr.mxu0 0.0
        %1763 = vmatpush1.msra.mxu0 0.0
        %1764 = vmatprep.subr.mxu0 0.0
        %1765 = vmatpush1.msra.mxu0 0.0
        %1766 = vmatprep.subr.mxu0 0.0
        %1767 = vmatpush1.msra.mxu0 0.0
        %1768 = vmatprep.subr.mxu0 0.0
        %1769 = vmatpush1.msra.mxu0 0.0
        %1770 = vmatprep.subr.mxu0 0.0
        %1771 = vmatpush1.msra.mxu0 0.0
        %1772 = vmatprep.subr.mxu0 0.0
        %1773 = vmatpush1.msra.mxu0 0.0
        %1774 = vmatprep.subr.mxu0 0.0
        %1775 = vmatpush1.msra.mxu0 0.0
        %1776 = vmatprep.mubr.f32.mxu0 0.0
        %1777 = vmatmul.mubr.f32.gmra.mrb[0].mxu0 %v1710
        %v1778 = vpop.f32.mrb[0].mxu0
        %v1779 = vadd.f32 0.0, %v1778
        %v1780 = vpop.f32.mrb[0].mxu0
        %1781 = vdwg.mxu0
        %v1783 = vsel %vm1518, %v1562, 0
        %1785 = vmatprep.subr.mxu0 0.0
        %1786 = vmatpush1.msra.mxu0 %v1210
        %1787 = vmatprep.subr.mxu0 0.0
        %1788 = vmatpush1.msra.mxu0 0.0
        %1789 = vmatprep.subr.mxu0 0.0
        %1790 = vmatpush1.msra.mxu0 0.0
        %1791 = vmatprep.subr.mxu0 0.0
        %1792 = vmatpush1.msra.mxu0 0.0
        %1793 = vmatprep.subr.mxu0 0.0
        %1794 = vmatpush1.msra.mxu0 0.0
        %1795 = vmatprep.subr.mxu0 0.0
        %1796 = vmatpush1.msra.mxu0 0.0
        %1797 = vmatprep.subr.mxu0 0.0
        %1798 = vmatpush1.msra.mxu0 0.0
        %1799 = vmatprep.subr.mxu0 0.0
        %1800 = vmatpush1.msra.mxu0 0.0
        %1801 = vmatprep.subr.mxu0 0.0
        %1802 = vmatpush1.msra.mxu0 0.0
        %1803 = vmatprep.subr.mxu0 0.0
        %1804 = vmatpush1.msra.mxu0 0.0
        %1805 = vmatprep.subr.mxu0 0.0
        %1806 = vmatpush1.msra.mxu0 0.0
        %1807 = vmatprep.subr.mxu0 0.0
        %1808 = vmatpush1.msra.mxu0 0.0
        %1809 = vmatprep.subr.mxu0 0.0
        %1810 = vmatpush1.msra.mxu0 0.0
        %1811 = vmatprep.subr.mxu0 0.0
        %1812 = vmatpush1.msra.mxu0 0.0
        %1813 = vmatprep.subr.mxu0 0.0
        %1814 = vmatpush1.msra.mxu0 0.0
        %1815 = vmatprep.subr.mxu0 0.0
        %1816 = vmatpush1.msra.mxu0 0.0
        %1817 = vmatprep.subr.mxu0 0.0
        %1818 = vmatpush1.msra.mxu0 0.0
        %1819 = vmatprep.subr.mxu0 0.0
        %1820 = vmatpush1.msra.mxu0 0.0
        %1821 = vmatprep.subr.mxu0 0.0
        %1822 = vmatpush1.msra.mxu0 0.0
        %1823 = vmatprep.subr.mxu0 0.0
        %1824 = vmatpush1.msra.mxu0 0.0
        %1825 = vmatprep.subr.mxu0 0.0
        %1826 = vmatpush1.msra.mxu0 0.0
        %1827 = vmatprep.subr.mxu0 0.0
        %1828 = vmatpush1.msra.mxu0 0.0
        %1829 = vmatprep.subr.mxu0 0.0
        %1830 = vmatpush1.msra.mxu0 0.0
        %1831 = vmatprep.subr.mxu0 0.0
        %1832 = vmatpush1.msra.mxu0 0.0
        %1833 = vmatprep.subr.mxu0 0.0
        %1834 = vmatpush1.msra.mxu0 0.0
        %1835 = vmatprep.subr.mxu0 0.0
        %1836 = vmatpush1.msra.mxu0 0.0
        %1837 = vmatprep.subr.mxu0 0.0
        %1838 = vmatpush1.msra.mxu0 0.0
        %1839 = vmatprep.subr.mxu0 0.0
        %1840 = vmatpush1.msra.mxu0 0.0
        %1841 = vmatprep.subr.mxu0 0.0
        %1842 = vmatpush1.msra.mxu0 0.0
        %1843 = vmatprep.subr.mxu0 0.0
        %1844 = vmatpush1.msra.mxu0 0.0
        %1845 = vmatprep.subr.mxu0 0.0
        %1846 = vmatpush1.msra.mxu0 0.0
        %1847 = vmatprep.subr.mxu0 0.0
        %1848 = vmatpush1.msra.mxu0 0.0
        %1849 = vmatprep.mubr.f32.mxu0 0.0
        %1850 = vmatmul.mubr.f32.gmra.mrb[0].mxu0 %v1783
        %v1851 = vpop.f32.mrb[0].mxu0
        %v1852 = vadd.f32 0.0, %v1851
        %v1853 = vpop.f32.mrb[0].mxu0
        %1854 = vdwg.mxu0
        %v1855 = vld [vmem:[%s5] sm:$0xff]
        %v1856 = vld [vmem:[%s5 + $0x8] sm:$0xff]
        %v1857 = vld [vmem:[%s5 + $0x10] sm:$0xff]
        %v1858 = vld [vmem:[%s5 + $0x18] sm:$0xff]
        %v1859 = vld [vmem:[%s5 + $0x20] sm:$0xff]
        %v1860 = vld [vmem:[%s5 + $0x28] sm:$0xff]
        %v1861 = vld [vmem:[%s5 + $0x30] sm:$0xff]
        %v1862 = vld [vmem:[%s5 + $0x38] sm:$0xff]
        %v1864 = vsel %vm1213, %v1633, 0
        %1866 = vmatprep.subr.mxu0 0.0
        %1867 = vmatpush1.msra.mxu0 %v1855
        %1868 = vmatprep.subr.mxu0 0.0
        %1869 = vmatpush1.msra.mxu0 %v1856
        %1870 = vmatprep.subr.mxu0 0.0
        %1871 = vmatpush1.msra.mxu0 0.0
        %1872 = vmatprep.subr.mxu0 0.0
        %1873 = vmatpush1.msra.mxu0 0.0
        %1874 = vmatprep.subr.mxu0 0.0
        %1875 = vmatpush1.msra.mxu0 0.0
        %1876 = vmatprep.subr.mxu0 0.0
        %1877 = vmatpush1.msra.mxu0 0.0
        %1878 = vmatprep.subr.mxu0 0.0
        %1879 = vmatpush1.msra.mxu0 0.0
        %1880 = vmatprep.subr.mxu0 0.0
        %1881 = vmatpush1.msra.mxu0 0.0
        %1882 = vmatprep.subr.mxu0 0.0
        %1883 = vmatpush1.msra.mxu0 0.0
        %1884 = vmatprep.subr.mxu0 0.0
        %1885 = vmatpush1.msra.mxu0 0.0
        %1886 = vmatprep.subr.mxu0 0.0
        %1887 = vmatpush1.msra.mxu0 0.0
        %1888 = vmatprep.subr.mxu0 0.0
        %1889 = vmatpush1.msra.mxu0 0.0
        %1890 = vmatprep.subr.mxu0 0.0
        %1891 = vmatpush1.msra.mxu0 0.0
        %1892 = vmatprep.subr.mxu0 0.0
        %1893 = vmatpush1.msra.mxu0 0.0
        %1894 = vmatprep.subr.mxu0 0.0
        %1895 = vmatpush1.msra.mxu0 0.0
        %1896 = vmatprep.subr.mxu0 0.0
        %1897 = vmatpush1.msra.mxu0 0.0
        %1898 = vmatprep.subr.mxu0 0.0
        %1899 = vmatpush1.msra.mxu0 0.0
        %1900 = vmatprep.subr.mxu0 0.0
        %1901 = vmatpush1.msra.mxu0 0.0
        %1902 = vmatprep.subr.mxu0 0.0
        %1903 = vmatpush1.msra.mxu0 0.0
        %1904 = vmatprep.subr.mxu0 0.0
        %1905 = vmatpush1.msra.mxu0 0.0
        %1906 = vmatprep.subr.mxu0 0.0
        %1907 = vmatpush1.msra.mxu0 0.0
        %1908 = vmatprep.subr.mxu0 0.0
        %1909 = vmatpush1.msra.mxu0 0.0
        %1910 = vmatprep.subr.mxu0 0.0
        %1911 = vmatpush1.msra.mxu0 0.0
        %1912 = vmatprep.subr.mxu0 0.0
        %1913 = vmatpush1.msra.mxu0 0.0
        %1914 = vmatprep.subr.mxu0 0.0
        %1915 = vmatpush1.msra.mxu0 0.0
        %1916 = vmatprep.subr.mxu0 0.0
        %1917 = vmatpush1.msra.mxu0 0.0
        %1918 = vmatprep.subr.mxu0 0.0
        %1919 = vmatpush1.msra.mxu0 0.0
        %1920 = vmatprep.subr.mxu0 0.0
        %1921 = vmatpush1.msra.mxu0 0.0
        %1922 = vmatprep.subr.mxu0 0.0
        %1923 = vmatpush1.msra.mxu0 0.0
        %1924 = vmatprep.subr.mxu0 0.0
        %1925 = vmatpush1.msra.mxu0 0.0
        %1926 = vmatprep.subr.mxu0 0.0
        %1927 = vmatpush1.msra.mxu0 0.0
        %1928 = vmatprep.subr.mxu0 0.0
        %1929 = vmatpush1.msra.mxu0 0.0
        %1930 = vmatprep.mubr.f32.mxu0 0.0
        %1931 = vmatmul.mubr.f32.gmra.mrb[0].mxu0 %v1864
        %v1932 = vpop.f32.mrb[0].mxu0
        %v1933 = vadd.f32 0.0, %v1932
        %v1934 = vpop.f32.mrb[0].mxu0
        %1935 = vdwg.mxu0
        %v1937 = vsel %vm1213, %v1706, 0
        %1939 = vmatprep.subr.mxu0 0.0
        %1940 = vmatpush1.msra.mxu0 %v1857
        %1941 = vmatprep.subr.mxu0 0.0
        %1942 = vmatpush1.msra.mxu0 %v1858
        %1943 = vmatprep.subr.mxu0 0.0
        %1944 = vmatpush1.msra.mxu0 0.0
        %1945 = vmatprep.subr.mxu0 0.0
        %1946 = vmatpush1.msra.mxu0 0.0
        %1947 = vmatprep.subr.mxu0 0.0
        %1948 = vmatpush1.msra.mxu0 0.0
        %1949 = vmatprep.subr.mxu0 0.0
        %1950 = vmatpush1.msra.mxu0 0.0
        %1951 = vmatprep.subr.mxu0 0.0
        %1952 = vmatpush1.msra.mxu0 0.0
        %1953 = vmatprep.subr.mxu0 0.0
        %1954 = vmatpush1.msra.mxu0 0.0
        %1955 = vmatprep.subr.mxu0 0.0
        %1956 = vmatpush1.msra.mxu0 0.0
        %1957 = vmatprep.subr.mxu0 0.0
        %1958 = vmatpush1.msra.mxu0 0.0
        %1959 = vmatprep.subr.mxu0 0.0
        %1960 = vmatpush1.msra.mxu0 0.0
        %1961 = vmatprep.subr.mxu0 0.0
        %1962 = vmatpush1.msra.mxu0 0.0
        %1963 = vmatprep.subr.mxu0 0.0
        %1964 = vmatpush1.msra.mxu0 0.0
        %1965 = vmatprep.subr.mxu0 0.0
        %1966 = vmatpush1.msra.mxu0 0.0
        %1967 = vmatprep.subr.mxu0 0.0
        %1968 = vmatpush1.msra.mxu0 0.0
        %1969 = vmatprep.subr.mxu0 0.0
        %1970 = vmatpush1.msra.mxu0 0.0
        %1971 = vmatprep.subr.mxu0 0.0
        %1972 = vmatpush1.msra.mxu0 0.0
        %1973 = vmatprep.subr.mxu0 0.0
        %1974 = vmatpush1.msra.mxu0 0.0
        %1975 = vmatprep.subr.mxu0 0.0
        %1976 = vmatpush1.msra.mxu0 0.0
        %1977 = vmatprep.subr.mxu0 0.0
        %1978 = vmatpush1.msra.mxu0 0.0
        %1979 = vmatprep.subr.mxu0 0.0
        %1980 = vmatpush1.msra.mxu0 0.0
        %1981 = vmatprep.subr.mxu0 0.0
        %1982 = vmatpush1.msra.mxu0 0.0
        %1983 = vmatprep.subr.mxu0 0.0
        %1984 = vmatpush1.msra.mxu0 0.0
        %1985 = vmatprep.subr.mxu0 0.0
        %1986 = vmatpush1.msra.mxu0 0.0
        %1987 = vmatprep.subr.mxu0 0.0
        %1988 = vmatpush1.msra.mxu0 0.0
        %1989 = vmatprep.subr.mxu0 0.0
        %1990 = vmatpush1.msra.mxu0 0.0
        %1991 = vmatprep.subr.mxu0 0.0
        %1992 = vmatpush1.msra.mxu0 0.0
        %1993 = vmatprep.subr.mxu0 0.0
        %1994 = vmatpush1.msra.mxu0 0.0
        %1995 = vmatprep.subr.mxu0 0.0
        %1996 = vmatpush1.msra.mxu0 0.0
        %1997 = vmatprep.subr.mxu0 0.0
        %1998 = vmatpush1.msra.mxu0 0.0
        %1999 = vmatprep.subr.mxu0 0.0
        %2000 = vmatpush1.msra.mxu0 0.0
        %2001 = vmatprep.subr.mxu0 0.0
        %2002 = vmatpush1.msra.mxu0 0.0
        %2003 = vmatprep.mubr.f32.mxu0 0.0
        %2004 = vmatmul.mubr.f32.gmra.mrb[0].mxu0 %v1937
        %v2005 = vpop.f32.mrb[0].mxu0
        %v2006 = vadd.f32 0.0, %v2005
        %v2007 = vpop.f32.mrb[0].mxu0
        %2008 = vdwg.mxu0
        %v2010 = vsel %vm1213, %v1779, 0
        %2012 = vmatprep.subr.mxu0 0.0
        %2013 = vmatpush1.msra.mxu0 %v1859
        %2014 = vmatprep.subr.mxu0 0.0
        %2015 = vmatpush1.msra.mxu0 %v1860
        %2016 = vmatprep.subr.mxu0 0.0
        %2017 = vmatpush1.msra.mxu0 0.0
        %2018 = vmatprep.subr.mxu0 0.0
        %2019 = vmatpush1.msra.mxu0 0.0
        %2020 = vmatprep.subr.mxu0 0.0
        %2021 = vmatpush1.msra.mxu0 0.0
        %2022 = vmatprep.subr.mxu0 0.0
        %2023 = vmatpush1.msra.mxu0 0.0
        %2024 = vmatprep.subr.mxu0 0.0
        %2025 = vmatpush1.msra.mxu0 0.0
        %2026 = vmatprep.subr.mxu0 0.0
        %2027 = vmatpush1.msra.mxu0 0.0
        %2028 = vmatprep.subr.mxu0 0.0
        %2029 = vmatpush1.msra.mxu0 0.0
        %2030 = vmatprep.subr.mxu0 0.0
        %2031 = vmatpush1.msra.mxu0 0.0
        %2032 = vmatprep.subr.mxu0 0.0
        %2033 = vmatpush1.msra.mxu0 0.0
        %2034 = vmatprep.subr.mxu0 0.0
        %2035 = vmatpush1.msra.mxu0 0.0
        %2036 = vmatprep.subr.mxu0 0.0
        %2037 = vmatpush1.msra.mxu0 0.0
        %2038 = vmatprep.subr.mxu0 0.0
        %2039 = vmatpush1.msra.mxu0 0.0
        %2040 = vmatprep.subr.mxu0 0.0
        %2041 = vmatpush1.msra.mxu0 0.0
        %2042 = vmatprep.subr.mxu0 0.0
        %2043 = vmatpush1.msra.mxu0 0.0
        %2044 = vmatprep.subr.mxu0 0.0
        %2045 = vmatpush1.msra.mxu0 0.0
        %2046 = vmatprep.subr.mxu0 0.0
        %2047 = vmatpush1.msra.mxu0 0.0
        %2048 = vmatprep.subr.mxu0 0.0
        %2049 = vmatpush1.msra.mxu0 0.0
        %2050 = vmatprep.subr.mxu0 0.0
        %2051 = vmatpush1.msra.mxu0 0.0
        %2052 = vmatprep.subr.mxu0 0.0
        %2053 = vmatpush1.msra.mxu0 0.0
        %2054 = vmatprep.subr.mxu0 0.0
        %2055 = vmatpush1.msra.mxu0 0.0
        %2056 = vmatprep.subr.mxu0 0.0
        %2057 = vmatpush1.msra.mxu0 0.0
        %2058 = vmatprep.subr.mxu0 0.0
        %2059 = vmatpush1.msra.mxu0 0.0
        %2060 = vmatprep.subr.mxu0 0.0
        %2061 = vmatpush1.msra.mxu0 0.0
        %2062 = vmatprep.subr.mxu0 0.0
        %2063 = vmatpush1.msra.mxu0 0.0
        %2064 = vmatprep.subr.mxu0 0.0
        %2065 = vmatpush1.msra.mxu0 0.0
        %2066 = vmatprep.subr.mxu0 0.0
        %2067 = vmatpush1.msra.mxu0 0.0
        %2068 = vmatprep.subr.mxu0 0.0
        %2069 = vmatpush1.msra.mxu0 0.0
        %2070 = vmatprep.subr.mxu0 0.0
        %2071 = vmatpush1.msra.mxu0 0.0
        %2072 = vmatprep.subr.mxu0 0.0
        %2073 = vmatpush1.msra.mxu0 0.0
        %2074 = vmatprep.subr.mxu0 0.0
        %2075 = vmatpush1.msra.mxu0 0.0
        %2076 = vmatprep.mubr.f32.mxu0 0.0
        %2077 = vmatmul.mubr.f32.gmra.mrb[0].mxu0 %v2010
        %v2078 = vpop.f32.mrb[0].mxu0
        %v2079 = vadd.f32 0.0, %v2078
        %v2080 = vpop.f32.mrb[0].mxu0
        %2081 = vdwg.mxu0
        %v2083 = vsel %vm1213, %v1852, 0
        %2085 = vmatprep.subr.mxu0 0.0
        %2086 = vmatpush1.msra.mxu0 %v1861
        %2087 = vmatprep.subr.mxu0 0.0
        %2088 = vmatpush1.msra.mxu0 %v1862
        %2089 = vmatprep.subr.mxu0 0.0
        %2090 = vmatpush1.msra.mxu0 0.0
        %2091 = vmatprep.subr.mxu0 0.0
        %2092 = vmatpush1.msra.mxu0 0.0
        %2093 = vmatprep.subr.mxu0 0.0
        %2094 = vmatpush1.msra.mxu0 0.0
        %2095 = vmatprep.subr.mxu0 0.0
        %2096 = vmatpush1.msra.mxu0 0.0
        %2097 = vmatprep.subr.mxu0 0.0
        %2098 = vmatpush1.msra.mxu0 0.0
        %2099 = vmatprep.subr.mxu0 0.0
        %2100 = vmatpush1.msra.mxu0 0.0
        %2101 = vmatprep.subr.mxu0 0.0
        %2102 = vmatpush1.msra.mxu0 0.0
        %2103 = vmatprep.subr.mxu0 0.0
        %2104 = vmatpush1.msra.mxu0 0.0
        %2105 = vmatprep.subr.mxu0 0.0
        %2106 = vmatpush1.msra.mxu0 0.0
        %2107 = vmatprep.subr.mxu0 0.0
        %2108 = vmatpush1.msra.mxu0 0.0
        %2109 = vmatprep.subr.mxu0 0.0
        %2110 = vmatpush1.msra.mxu0 0.0
        %2111 = vmatprep.subr.mxu0 0.0
        %2112 = vmatpush1.msra.mxu0 0.0
        %2113 = vmatprep.subr.mxu0 0.0
        %2114 = vmatpush1.msra.mxu0 0.0
        %2115 = vmatprep.subr.mxu0 0.0
        %2116 = vmatpush1.msra.mxu0 0.0
        %2117 = vmatprep.subr.mxu0 0.0
        %2118 = vmatpush1.msra.mxu0 0.0
        %2119 = vmatprep.subr.mxu0 0.0
        %2120 = vmatpush1.msra.mxu0 0.0
        %2121 = vmatprep.subr.mxu0 0.0
        %2122 = vmatpush1.msra.mxu0 0.0
        %2123 = vmatprep.subr.mxu0 0.0
        %2124 = vmatpush1.msra.mxu0 0.0
        %2125 = vmatprep.subr.mxu0 0.0
        %2126 = vmatpush1.msra.mxu0 0.0
        %2127 = vmatprep.subr.mxu0 0.0
        %2128 = vmatpush1.msra.mxu0 0.0
        %2129 = vmatprep.subr.mxu0 0.0
        %2130 = vmatpush1.msra.mxu0 0.0
        %2131 = vmatprep.subr.mxu0 0.0
        %2132 = vmatpush1.msra.mxu0 0.0
        %2133 = vmatprep.subr.mxu0 0.0
        %2134 = vmatpush1.msra.mxu0 0.0
        %2135 = vmatprep.subr.mxu0 0.0
        %2136 = vmatpush1.msra.mxu0 0.0
        %2137 = vmatprep.subr.mxu0 0.0
        %2138 = vmatpush1.msra.mxu0 0.0
        %2139 = vmatprep.subr.mxu0 0.0
        %2140 = vmatpush1.msra.mxu0 0.0
        %2141 = vmatprep.subr.mxu0 0.0
        %2142 = vmatpush1.msra.mxu0 0.0
        %2143 = vmatprep.subr.mxu0 0.0
        %2144 = vmatpush1.msra.mxu0 0.0
        %2145 = vmatprep.subr.mxu0 0.0
        %2146 = vmatpush1.msra.mxu0 0.0
        %2147 = vmatprep.subr.mxu0 0.0
        %2148 = vmatpush1.msra.mxu0 0.0
        %2149 = vmatprep.mubr.f32.mxu0 0.0
        %2150 = vmatmul.mubr.f32.gmra.mrb[0].mxu0 %v2083
        %v2151 = vpop.f32.mrb[0].mxu0
        %v2152 = vadd.f32 0.0, %v2151
        %v2153 = vpop.f32.mrb[0].mxu0
        %2154 = vdwg.mxu0
        %v2155 = vsel %vm334, %v1933, 0.0
        %v2156 = vsel %vm334, %v2006, 0.0
        %v2157 = vadd.f32 %v2155, %v2156
        %v2158 = vsel %vm334, %v2079, 0.0
        %v2159 = vadd.f32 %v2157, %v2158
        %v2160 = vsel %vm334, %v2152, 0.0
        %v2161 = vadd.f32 %v2159, %v2160
        %v2162 = vld [vmem:[%s6] sm:$0x1]
        %v2164 = vlaneseq
        %v2165 = vshrl.u32 %v2164, 7
        %v2166 = vsub.s32 0, %v2165
        %v2167 = vrot.slane %v2162, %v2166
        %v2169 = vadd.f32 %v2161, %v2167
        %2170 = vst.msk [vmem:[%s304] sm:$0xff] %vm334, %v2169
        %s2171 = sand.u32 %s202, 1
        %s2172 = scalar_lea.sflag [#allocation3], %s2171
        %s2173 = sand.u32 %s202, 1
        %s2174 = smul.addr %s2173, 8
        %s2175 = scalar_lea.vmem [#allocation2], %s2174
        // Predicated region
        $region49: #{tpu_custom_call.1} parent=47 // pred_check
          %p2176 = pneg %p212
        $region50: #{tpu_custom_call.1} parent=47 // pred_check_branch
          %2178 = sbr.rel (%p2176) target = $region52
        $region51: #{tpu_custom_call.1} parent=47 // pred_region
          %s2180 = ssub.s32 128, 128
          %2181 = vsyncadd %s2172, %s2180
          %s2182 = sadd.s32 %s26, %s25
          %s2183 = smul.addr %s2182, 128
          %s2184 = scalar_lea.hbm %s7, %s2183
          %s2186 = sshll.u32 %s2175, 4
          %s2187 = int_to_ptr.vmem [resolvable:$true] %s2186
          %2189 = dma.vmem_to_hbm [thread:$0]  %s2187, 128, %s2184, %s2172
        $region52: #{tpu_custom_call.1} parent=47 // pred_fallthru
          _
      $region48: #{tpu_custom_call.1} parent=5 // pred_fallthru
        _
      %p2190 = scmp.le.s32.totalorder 2, %s16
      // Predicated region
      $region53: #{tpu_custom_call.1} parent=5 // pred_check
        %p2191 = pneg %p2190
      $region54: #{tpu_custom_call.1} parent=5 // pred_check_branch
        %2193 = sbr.rel (%p2191) target = $region56
      $region55: #{tpu_custom_call.1} parent=5 // pred_region
        %s2194 = ssub.s32 %s16, 2
        // Predicated region
        $region57: #{tpu_custom_call.1} parent=55 // pred_check
          %p2195 = pneg %p218
        $region58: #{tpu_custom_call.1} parent=55 // pred_check_branch
          %2197 = sbr.rel (%p2195) target = $region60
        $region59: #{tpu_custom_call.1} parent=55 // pred_region
          %s2198 = sand.u32 %s203, 1
          %s2199 = scalar_lea.sflag [#allocation3], %s2198
          %s2200 = sand.u32 %s203, 1
          %s2201 = smul.addr %s2200, 8
          %s2202 = scalar_lea.vmem [#allocation2], %s2201
          %2203 = dma.done %s2199, 128
        $region60: #{tpu_custom_call.1} parent=55 // pred_fallthru
          _
      $region56: #{tpu_custom_call.1} parent=5 // pred_fallthru
        _
    $region6: #{tpu_custom_call.1} parent=1 // loop_footer
      %s20 = sadd.s32 1, %s16
    $region7: #{tpu_custom_call.1} parent=1 // loop_footer_branch
      %15 = sbr.rel target = $region3
    $region8: #{tpu_custom_call.1} parent=1 // loop_exit
      _
    %2204 = vsyncpa [#allocation3], 1
    %s2205 = scalar_lea.sflag [#allocation3], 1
    %2206 = vsyncpa %s2205, 1

</llo_original>
